<compile_context>
chip_gen: v6e
topology: v6e:2x2x1
jax: 0.10.0
libtpu: 0.0.40
codegen_flags: <defaults>
</compile_context>

<pallas_src>
import functools

import jax
import jax.numpy as jnp
from jax import lax
from jax.experimental import pallas as pl
from jax.experimental.pallas import tpu as pltpu


def _pick_tile(n, candidates):
    for t in candidates:
        if n % t == 0:
            return t
    return n


def _vmem_budget(nbytes_estimate):
    # 2x headroom over the static per-call footprint, clamped to stay well
    # inside a v7x TensorCore's 64 MiB physical VMEM.
    return int(min(max(2 * nbytes_estimate, 16 * 1024 * 1024), 48 * 1024 * 1024))


# ---------------------------------------------------------------------------
# Prologue kernel: K / V 1x1 projections computed ONCE per token.
# Input blocks are channels-first (1, C, tp) f32; outputs are channels-last
# bf16 (ready for the flash kernel's NT/NN MXU path).
# ---------------------------------------------------------------------------
def _kv_proj_kernel(x_ref, wk_ref, bk_ref, wv_ref, bv_ref, k_ref, v_ref):
    # One per-tile XLU transpose replaces a full-tensor HBM transpose.
    xt = jnp.transpose(x_ref[0]).astype(jnp.bfloat16)                # (tp, C)
    k = jnp.dot(xt, wk_ref[...], preferred_element_type=jnp.float32) + bk_ref[...]
    v = jnp.dot(xt, wv_ref[...], preferred_element_type=jnp.float32) + bv_ref[...]
    k_ref[0] = k.astype(jnp.bfloat16)
    v_ref[0] = v.astype(jnp.bfloat16)


def _project_kv(x_cf, wk_t, bk, wv_t, bv, tp, vmem_limit):
    B, C, HW = x_cf.shape
    w_spec = pl.BlockSpec((C, C), lambda b, i: (0, 0))
    b_spec = pl.BlockSpec((1, C), lambda b, i: (0, 0))
    return pl.pallas_call(
        _kv_proj_kernel,
        out_shape=(jax.ShapeDtypeStruct((B, HW, C), jnp.bfloat16),
                   jax.ShapeDtypeStruct((B, HW, C), jnp.bfloat16)),
        grid_spec=pltpu.PrefetchScalarGridSpec(
            num_scalar_prefetch=0,
            grid=(B, HW // tp),
            in_specs=[pl.BlockSpec((1, C, tp), lambda b, i: (b, 0, i)),
                      w_spec, b_spec,    # k
                      w_spec, b_spec],   # v
            out_specs=[pl.BlockSpec((1, tp, C), lambda b, i: (b, i, 0)),
                       pl.BlockSpec((1, tp, C), lambda b, i: (b, i, 0))]),
        compiler_params=pltpu.CompilerParams(
            dimension_semantics=("parallel", "parallel"),
            vmem_limit_bytes=vmem_limit),
    )(x_cf, wk_t, bk, wv_t, bv)


# ---------------------------------------------------------------------------
# Flash-attention kernel: q projection (per q tile), online softmax over
# streamed bf16 K/V tiles, project_out + residual, channels-first output.
# ---------------------------------------------------------------------------
def _flash_attn_kernel(xq_ref, k_ref, v_ref, wq_ref, bq_ref, wo_ref, bo_ref,
                       o_ref, q_sc, m_sc, l_sc, acc_sc, *, scale):
    kv = pl.program_id(2)

    @pl.when(kv == 0)
    def _init():
        # q projection: computed once per (b, q-tile) sweep, not per kv step.
        xt = jnp.transpose(xq_ref[0]).astype(jnp.bfloat16)           # (tq, C)
        q = jnp.dot(xt, wq_ref[...],
                    preferred_element_type=jnp.float32) + bq_ref[...]
        # Fold 1/sqrt(C) into q (saves a (tq, tk) VPU multiply every kv step).
        q_sc[...] = (q * scale).astype(jnp.bfloat16)
        m_sc[...] = jnp.full_like(m_sc, -jnp.inf)
        l_sc[...] = jnp.zeros_like(l_sc)
        acc_sc[...] = jnp.zeros_like(acc_sc)

    k = k_ref[0]                                                     # (tk, C) bf16
    v = v_ref[0]                                                     # (tk, C) bf16

    # logits[i, j] = <q_i, k_j> (scale already folded); NT contraction, no k.T.
    s = lax.dot_general(q_sc[...], k,
                        dimension_numbers=(((1,), (1,)), ((), ())),
                        preferred_element_type=jnp.float32)

    # Online softmax over the key axis (f32).
    # TODO(synk): m/l could be widened to lane-dense (tq, 128) scratch if VALU
    # masked stores ever become the binding slot.
    m_prev = m_sc[...]
    m_new = jnp.maximum(m_prev, jnp.max(s, axis=-1, keepdims=True))
    alpha = jnp.exp(m_prev - m_new)
    p = jnp.exp(s - m_new)
    l_sc[...] = alpha * l_sc[...] + jnp.sum(p, axis=-1, keepdims=True)
    acc_sc[...] = alpha * acc_sc[...] + jnp.dot(
        p.astype(jnp.bfloat16), v, preferred_element_type=jnp.float32)
    m_sc[...] = m_new

    @pl.when(kv == pl.num_programs(2) - 1)
    def _finalize():
        # Exact division: runs once per q tile, so approx reciprocal saves
        # nothing and exact improves accuracy.
        out = acc_sc[...] / l_sc[...]                                # (tq, C)
        # project_out emitted directly channels-first: Wo(Cout,Cin) . out^T
        # via an NT contraction -> (C, tq); residual add in-kernel.
        proj_cf = lax.dot_general(wo_ref[...], out.astype(jnp.bfloat16),
                                  dimension_numbers=(((1,), (1,)), ((), ())),
                                  preferred_element_type=jnp.float32) + bo_ref[...]
        o_ref[0] = xq_ref[0] + proj_cf


def spatial_self_attention(x, params, *, tq=None, tk=None, tp=None):
    """x: (B, C, H, W) float32, NCHW (PyTorch convention). Returns NCHW f32."""
    B, C, H, W = x.shape
    HW = H * W

    # Tile defaults per perf review: tq=256, tk=512/256 fill the 2x256x256 MXU
    # on v6e/v7x and amortize per-step overhead; they stay correct (and
    # VMEM-cheap) on v5e, where bytes -- not tile width -- are the lever.
    tq = tq if tq is not None else _pick_tile(HW, (256, 128))
    tk = tk if tk is not None else _pick_tile(HW, (512, 256, 128))
    tp = tp if tp is not None else _pick_tile(HW, (512, 256, 128))
    assert HW % tq == 0 and HW % tk == 0 and HW % tp == 0, (HW, tq, tk, tp)

    # NCHW -> (B, C, HW) is a pure reshape: NO wrapper-side HBM transpose on
    # input or output; all layout changes are per-tile inside the kernels.
    x_cf = x.reshape(B, C, HW)

    # Conv2d 1x1 weights: (out, in) -> (in, out) for the NN projections; the
    # output projection keeps the original (out, in) orientation (NT matmul).
    wq_t = params["wq"].T.astype(jnp.bfloat16)
    wk_t = params["wk"].T.astype(jnp.bfloat16)
    wv_t = params["wv"].T.astype(jnp.bfloat16)
    wo = params["wo"].astype(jnp.bfloat16)
    bq = params["bq"].reshape(1, C).astype(jnp.float32)
    bk = params["bk"].reshape(1, C).astype(jnp.float32)
    bv = params["bv"].reshape(1, C).astype(jnp.float32)
    bo = params["bo"].reshape(C, 1).astype(jnp.float32)

    # ---- Prologue: K/V projected once, channels-last bf16 in HBM. ----
    proj_bytes = (2 * C * tp * 4          # x tile, double-buffered
                  + 4 * C * C * 2         # wk, wv
                  + 4 * C * 4             # biases
                  + 4 * tp * C * 2)       # k, v output tiles, double-buffered
    k_all, v_all = _project_kv(x_cf, wk_t, bk, wv_t, bv, tp,
                               _vmem_budget(proj_bytes))

    # ---- Flash attention + q / project_out projections + residual. ----
    grid = (B, HW // tq, HW // tk)

    w_spec = pl.BlockSpec((C, C), lambda b, qi, ki: (0, 0))
    bq_spec = pl.BlockSpec((1, C), lambda b, qi, ki: (0, 0))
    bo_spec = pl.BlockSpec((C, 1), lambda b, qi, ki: (0, 0))
    xq_spec = pl.BlockSpec((1, C, tq), lambda b, qi, ki: (b, 0, qi))
    kv_spec = pl.BlockSpec((1, tk, C), lambda b, qi, ki: (b, ki, 0))
    o_spec = pl.BlockSpec((1, C, tq), lambda b, qi, ki: (b, 0, qi))
    # TODO(synk): pipeline_mode=pl.Buffered(3) on kv_spec / Buffered(1) on the
    # grid-invariant weights is a further small tweak once verified on the
    # target jax/libtpu build; default double-buffering is kept here.

    flash_bytes = (2 * C * tq * 4         # x tile (f32)
                   + 4 * tk * C * 2       # k + v tiles (bf16), double-buffered
                   + 4 * C * C * 2        # wq, wo
                   + 8 * C * 4            # biases
                   + 2 * C * tq * 4       # output tile
                   + tq * C * 2           # q scratch
                   + tq * C * 4           # acc scratch
                   + 2 * tq * 128 * 4)    # m/l scratch (lane-padded)

    kernel = functools.partial(_flash_attn_kernel,
                               scale=float(int(C) ** (-0.5)))

    out_cf = pl.pallas_call(
        kernel,
        out_shape=jax.ShapeDtypeStruct((B, C, HW), jnp.float32),
        grid_spec=pltpu.PrefetchScalarGridSpec(
            num_scalar_prefetch=0,
            grid=grid,
            in_specs=[xq_spec, kv_spec, kv_spec,
                      w_spec, bq_spec,    # q projection
                      w_spec, bo_spec],   # project_out
            out_specs=o_spec,
            scratch_shapes=[
                pltpu.VMEM((tq, C), jnp.bfloat16),   # cached (scaled) q tile
                pltpu.VMEM((tq, 1), jnp.float32),    # running max m
                pltpu.VMEM((tq, 1), jnp.float32),    # running sum l
                pltpu.VMEM((tq, C), jnp.float32),    # output accumulator
            ]),
        compiler_params=pltpu.CompilerParams(
            dimension_semantics=("parallel", "parallel", "arbitrary"),
            vmem_limit_bytes=_vmem_budget(flash_bytes)),
    )(x_cf, k_all, v_all, wq_t, bq, wo, bo)

    return out_cf.reshape(B, C, H, W)


def _ref_forward(x, params):
    """Pure-JAX f32 reference mirroring the PyTorch forward exactly."""
    B, C, H, W = x.shape

    def conv1x1(t, w, b):
        return jnp.einsum("oc,bchw->bohw", w, t) + b[None, :, None, None]

    q = conv1x1(x, params["wq"], params["bq"])
    k = conv1x1(x, params["wk"], params["bk"])
    v = conv1x1(x, params["wv"], params["bv"])

    q = q.reshape(B, C, H * W).transpose(0, 2, 1)          # b (hw) c
    k = k.reshape(B, C, H * W)                             # b c (hw)
    w_ = jnp.einsum("bij,bjk->bik", q, k) * (int(C) ** (-0.5))
    w_ = jax.nn.softmax(w_, axis=2)
    v = v.reshape(B, C, H * W)
    h_ = jnp.einsum("bij,bjk->bik", v, w_.transpose(0, 2, 1))
    h_ = h_.reshape(B, C, H, W)
    h_ = conv1x1(h_, params["wo"], params["bo"])
    return x + h_


def init_params(key, in_channels):
    """Deterministic parameter init (Conv2d-style uniform bounds)."""
    ks = jax.random.split(key, 9)
    bound = 1.0 / (in_channels ** 0.5)

    def u(k, shape):
        return jax.random.uniform(k, shape, jnp.float32, -bound, bound)

    return {
        "wq": u(ks[0], (in_channels, in_channels)), "bq": u(ks[1], (in_channels,)),
        "wk": u(ks[2], (in_channels, in_channels)), "bk": u(ks[3], (in_channels,)),
        "wv": u(ks[4], (in_channels, in_channels)), "bv": u(ks[5], (in_channels,)),
        "wo": u(ks[6], (in_channels, in_channels)), "bo": u(ks[7], (in_channels,)),
        # GroupNorm(32, C) affine params: present in the module but its output
        # (h_x) is discarded by the reference forward, so they are unused.
        "gn_gamma": jnp.ones((in_channels,), jnp.float32),
        "gn_beta": jnp.zeros((in_channels,), jnp.float32),
    }


if __name__ == "__main__":
    # HW = 1024 exercises multiple q tiles (4 x 256) and kv tiles (2 x 512).
    # C = 64 is test-only (divisible by 32 for GroupNorm); real LDM channel
    # counts (256 / 512) fill the 128-lane vregs.
    B, C, H, W = 2, 64, 32, 32
    key = jax.random.PRNGKey(0)
    k_x, k_p = jax.random.split(key)
    x = jax.random.normal(k_x, (B, C, H, W), jnp.float32)
    params = init_params(k_p, C)

    out = jax.block_until_ready(spatial_self_attention(x, params))
    ref = jax.block_until_ready(_ref_forward(x, params))

    assert out.shape == (B, C, H, W)
    max_err = float(jnp.max(jnp.abs(out - ref)))
    # bf16 MXU operands with f32 accumulation -> loosened tolerance vs f32 ref.
    assert jnp.allclose(out, ref, rtol=5e-2, atol=5e-2), max_err
    print("KERNEL_OK")
</pallas_src>

<mosaic_0001>
module attributes {stable_mosaic.version = 11 : i64} {
  func.func @_kv_proj_kernel(%arg0: i32, %arg1: i32, %arg2: memref<1x64x512xf32, #tpu.memory_space<vmem>>, %arg3: memref<64x64xbf16, #tpu.memory_space<vmem>>, %arg4: memref<1x64xf32, #tpu.memory_space<vmem>>, %arg5: memref<64x64xbf16, #tpu.memory_space<vmem>>, %arg6: memref<1x64xf32, #tpu.memory_space<vmem>>, %arg7: memref<1x512x64xbf16, #tpu.memory_space<vmem>>, %arg8: memref<1x512x64xbf16, #tpu.memory_space<vmem>>) attributes {dimension_semantics = [#tpu.dimension_semantics<parallel>, #tpu.dimension_semantics<parallel>], iteration_bounds = array<i64: 2, 2>, scalar_prefetch = 0 : i64, scratch_operands = 0 : i64, tpu.core_type = #tpu.core_type<tc>, window_params = [{transform_indices = @transform_0, window_bounds = array<i64: 1, 64, 512>}, {pipeline_mode = #tpu.pipeline_mode<synchronous>, transform_indices = @transform_1, window_bounds = array<i64: 64, 64>}, {pipeline_mode = #tpu.pipeline_mode<synchronous>, transform_indices = @transform_2, window_bounds = array<i64: 1, 64>}, {pipeline_mode = #tpu.pipeline_mode<synchronous>, transform_indices = @transform_3, window_bounds = array<i64: 64, 64>}, {pipeline_mode = #tpu.pipeline_mode<synchronous>, transform_indices = @transform_4, window_bounds = array<i64: 1, 64>}, {transform_indices = @transform_5, window_bounds = array<i64: 1, 512, 64>}, {transform_indices = @transform_6, window_bounds = array<i64: 1, 512, 64>}]} {
    %c0 = arith.constant 0 : index
    %c0_0 = arith.constant 0 : index
    %c0_1 = arith.constant 0 : index
    %0 = vector.load %arg2[%c0, %c0_0, %c0_1] : memref<1x64x512xf32, #tpu.memory_space<vmem>>, vector<1x64x512xf32>
    %1 = vector.shape_cast %0 : vector<1x64x512xf32> to vector<64x512xf32>
    %2 = tpu.transpose %1, [1, 0] : vector<64x512xf32> -> vector<512x64xf32>
    %3 = arith.truncf %2 : vector<512x64xf32> to vector<512x64xbf16>
    %c0_2 = arith.constant 0 : index
    %c0_3 = arith.constant 0 : index
    %4 = vector.load %arg3[%c0_2, %c0_3] : memref<64x64xbf16, #tpu.memory_space<vmem>>, vector<64x64xbf16>
    %cst = arith.constant dense<0.000000e+00> : vector<512x64xf32>
    %5 = tpu.matmul %3, %4, %cst {dimension_numbers = #tpu.dot_dimension_numbers<[1], [0], [0], [1], [0, 0, 1, 1], [], []>} : vector<512x64xbf16>, vector<64x64xbf16>, vector<512x64xf32> -> vector<512x64xf32>
    %c0_4 = arith.constant 0 : index
    %c0_5 = arith.constant 0 : index
    %6 = vector.load %arg4[%c0_4, %c0_5] : memref<1x64xf32, #tpu.memory_space<vmem>>, vector<1x64xf32>
    %7 = vector.broadcast %6 : vector<1x64xf32> to vector<512x64xf32>
    %8 = arith.addf %5, %7 : vector<512x64xf32>
    %c0_6 = arith.constant 0 : index
    %c0_7 = arith.constant 0 : index
    %9 = vector.load %arg5[%c0_6, %c0_7] : memref<64x64xbf16, #tpu.memory_space<vmem>>, vector<64x64xbf16>
    %cst_8 = arith.constant dense<0.000000e+00> : vector<512x64xf32>
    %10 = tpu.matmul %3, %9, %cst_8 {dimension_numbers = #tpu.dot_dimension_numbers<[1], [0], [0], [1], [0, 0, 1, 1], [], []>} : vector<512x64xbf16>, vector<64x64xbf16>, vector<512x64xf32> -> vector<512x64xf32>
    %c0_9 = arith.constant 0 : index
    %c0_10 = arith.constant 0 : index
    %11 = vector.load %arg6[%c0_9, %c0_10] : memref<1x64xf32, #tpu.memory_space<vmem>>, vector<1x64xf32>
    %12 = vector.broadcast %11 : vector<1x64xf32> to vector<512x64xf32>
    %13 = arith.addf %10, %12 : vector<512x64xf32>
    %14 = arith.truncf %8 : vector<512x64xf32> to vector<512x64xbf16>
    %c0_11 = arith.constant 0 : index
    %c0_12 = arith.constant 0 : index
    %c0_13 = arith.constant 0 : index
    %15 = vector.load %arg7[%c0_11, %c0_12, %c0_13] : memref<1x512x64xbf16, #tpu.memory_space<vmem>>, vector<1x512x64xbf16>
    %16 = vector.shape_cast %15 : vector<1x512x64xbf16> to vector<512x64xbf16>
    %17 = vector.shape_cast %14 : vector<512x64xbf16> to vector<1x512x64xbf16>
    tpu.vector_store %arg7[%c0_11, %c0_12, %c0_13], %17 {strides = array<i32>} : memref<1x512x64xbf16, #tpu.memory_space<vmem>>, vector<1x512x64xbf16>,
    %18 = arith.truncf %13 : vector<512x64xf32> to vector<512x64xbf16>
    %c0_14 = arith.constant 0 : index
    %c0_15 = arith.constant 0 : index
    %c0_16 = arith.constant 0 : index
    %19 = vector.load %arg8[%c0_14, %c0_15, %c0_16] : memref<1x512x64xbf16, #tpu.memory_space<vmem>>, vector<1x512x64xbf16>
    %20 = vector.shape_cast %19 : vector<1x512x64xbf16> to vector<512x64xbf16>
    %21 = vector.shape_cast %18 : vector<512x64xbf16> to vector<1x512x64xbf16>
    tpu.vector_store %arg8[%c0_14, %c0_15, %c0_16], %21 {strides = array<i32>} : memref<1x512x64xbf16, #tpu.memory_space<vmem>>, vector<1x512x64xbf16>,
    return
  }
  func.func @transform_0(%arg0: i32, %arg1: i32) -> (i32, i32, i32) {
    %c0_i32 = arith.constant 0 : i32
    %c0_i32_0 = arith.constant 0 : i32
    return %arg0, %c0_i32, %arg1 : i32, i32, i32
  }
  func.func @transform_1(%arg0: i32, %arg1: i32) -> (i32, i32) {
    %c0_i32 = arith.constant 0 : i32
    %c0_i32_0 = arith.constant 0 : i32
    %c0_i32_1 = arith.constant 0 : i32
    return %c0_i32, %c0_i32_0 : i32, i32
  }
  func.func @transform_2(%arg0: i32, %arg1: i32) -> (i32, i32) {
    %c0_i32 = arith.constant 0 : i32
    %c0_i32_0 = arith.constant 0 : i32
    %c0_i32_1 = arith.constant 0 : i32
    return %c0_i32, %c0_i32_0 : i32, i32
  }
  func.func @transform_3(%arg0: i32, %arg1: i32) -> (i32, i32) {
    %c0_i32 = arith.constant 0 : i32
    %c0_i32_0 = arith.constant 0 : i32
    %c0_i32_1 = arith.constant 0 : i32
    return %c0_i32, %c0_i32_0 : i32, i32
  }
  func.func @transform_4(%arg0: i32, %arg1: i32) -> (i32, i32) {
    %c0_i32 = arith.constant 0 : i32
    %c0_i32_0 = arith.constant 0 : i32
    %c0_i32_1 = arith.constant 0 : i32
    return %c0_i32, %c0_i32_0 : i32, i32
  }
  func.func @transform_5(%arg0: i32, %arg1: i32) -> (i32, i32, i32) {
    %c0_i32 = arith.constant 0 : i32
    %c0_i32_0 = arith.constant 0 : i32
    return %arg0, %arg1, %c0_i32 : i32, i32, i32
  }
  func.func @transform_6(%arg0: i32, %arg1: i32) -> (i32, i32, i32) {
    %c0_i32 = arith.constant 0 : i32
    %c0_i32_0 = arith.constant 0 : i32
    return %arg0, %arg1, %c0_i32 : i32, i32, i32
  }
}

</mosaic_0001>

<llo_original>
// kernel: tpu_custom_call.1
$region0: #{tpu_custom_call.1}
  #allocation0 [shape = 'u32[]', space=smem, size = 0x4, offset = 0x4, fixed_abs, tag = 'smem constant byte address 0x4 - core index']
  #allocation1 [shape = 'u32[144,128]{1,0:T(1,128)}', space=vmem, size = 0x12000, scoped, tag = 'internal scratch']
  %s0 = inlined_call_operand.hbm [shape: f32[2,64,1024], index: 0, kind: input, shape index: {}]
  %s1 = inlined_call_operand.hbm [shape: bf16[64,64], index: 1, kind: input, shape index: {}]
  %s2 = inlined_call_operand.vmem [shape: f32[1,64], index: 2, kind: input, shape index: {}]
  %s3 = inlined_call_operand.hbm [shape: bf16[64,64], index: 3, kind: input, shape index: {}]
  %s4 = inlined_call_operand.vmem [shape: f32[1,64], index: 4, kind: input, shape index: {}]
  %s5 = inlined_call_operand.vmem [shape: bf16[2,1024,64], index: 5, kind: output, shape index: {0}]
  %s6 = inlined_call_operand.vmem [shape: bf16[2,1024,64], index: 6, kind: output, shape index: {1}]
  %7 = xla_tuple %s5, %s6
  %s8 = sld [smem:[#allocation0]]
  $region73: #{tpu_custom_call.1} parent=0
    _
  %s10 = ssub.s32 1, %s8
  %s11 = scalar_select 0, %s10, %s8
  $region1: #{tpu_custom_call.1} parent=0
    #allocation2 [shape = 'u8[262144]{0}', space=vmem, size = 0x40000, scoped, tag = 'input window, operand 0']
    #allocation3 [shape = 's32[2]{0}', space=sflag, size = 0x8, scoped, tag = 'scoped memory for tpu_custom_call.1']
    #allocation4 [shape = 'u8[16384]{0}', space=vmem, size = 0x4000, scoped, tag = 'input window, operand 1, single buffered']
    #allocation5 [shape = 's32[1]{0}', space=sflag, size = 0x4, scoped, tag = 'scoped memory for tpu_custom_call.1']
    #allocation6 [shape = 'u8[16384]{0}', space=vmem, size = 0x4000, scoped, tag = 'input window, operand 3, single buffered']
    %12 = vsyncpa [#allocation3], 0
    %s13 = scalar_lea.sflag [#allocation3], 1
    %14 = vsyncpa %s13, 0
    %15 = vsyncpa [#allocation5], 0
    loop: start=0, step=1, limit=6
    $region2: #{tpu_custom_call.1} parent=1 // loop_pre_header
      _
    $region3: #{tpu_custom_call.1} parent=1 // loop_header
      %s17 = sphi 0, %s21
      %p18 = scmp.ge.s32.totalorder %s17, 6
      %s24 = sphi 0, %s36
      %s25 = sphi 0, %s32
      %s26 = sphi 0, %s24
      %s27 = sphi 0, %s25
      %s28 = sphi 0, %s26
      %s29 = sphi 0, %s27
      %s41 = sphi 0, %s43
      %s44 = sphi 0, %s41
      %s45 = sphi 0, %s44
      %s61 = sphi 0, %s45
      %s65 = sphi 0, %s65
      %s67 = sphi 0, %s65
      %s68 = sphi 0, %s67
      %s82 = sphi 0, %s68
      %s86 = sphi 0, %s86
      %s88 = sphi 0, %s86
      %s89 = sphi 0, %s88
      %s103 = sphi 0, %s89
      %s107 = sphi 0, %s107
      %s109 = sphi 0, %s107
      %s110 = sphi 0, %s109
      %s124 = sphi 0, %s110
      %s128 = sphi 0, %s128
      %s130 = sphi 0, %s128
      %s131 = sphi 0, %s130
      %s145 = sphi 0, %s131
      %s153 = sphi 0, %s155
      %s156 = sphi 0, %s153
      %s157 = sphi 0, %s156
      %s173 = sphi 0, %s157
      %s181 = sphi 0, %s183
      %s184 = sphi 0, %s181
      %s185 = sphi 0, %s184
      %s201 = sphi 0, %s185
    $region4: #{tpu_custom_call.1} parent=1 // loop_header_branch
      %20 = sbr.rel (%p18) target = $region8
    $region5: #{tpu_custom_call.1} parent=1 // loop_body
      %s22 = ssub.s32 %s17, 1
      %s23 = ssub.s32 %s17, 2
      %s30 = sadd.s32 1, %s25
      %p31 = scmp.ge.s32.totalorder %s30, 2
      %s32 = scalar_select %p31, 0, %s30
      %s33 = sadd.s32 1, %s24
      %s34 = scalar_select %p31, %s33, %s24
      %p35 = scmp.ge.s32.totalorder %s34, 2
      %s36 = scalar_select %p35, 0, %s34
      %s37 = ssub.s32 %s24, %s36
      %s38 = ssub.s32 %s25, %s32
      %s39 = sor.u32 %s37, %s38
      %p40 = scmp.eq.s32.totalorder %s39, 0
      %s42 = sadd.s32 %s41, 1
      %s43 = scalar_select %p40, %s41, %s42
      %p46 = pneg %p40
      %p47 = scmp.eq.s32.totalorder %s17, 3
      %p48 = por %p46, %p47
      %p49 = scmp.ne.s32.totalorder %s41, %s44
      %p50 = scmp.eq.s32.totalorder %s17, 0
      %p51 = por %p49, %p50
      %p52 = scmp.ne.s32.totalorder %s41, %s44
      %p53 = scmp.eq.s32.totalorder %s22, 3
      %p54 = por %p52, %p53
      %p55 = scmp.ne.s32.totalorder %s44, %s45
      %p56 = scmp.eq.s32.totalorder %s22, 0
      %p57 = por %p55, %p56
      %p58 = scmp.ne.s32.totalorder %s44, %s45
      %p59 = scmp.eq.s32.totalorder %s23, 3
      %p60 = por %p58, %p59
      %p62 = scmp.ne.s32.totalorder %s45, %s61
      %p63 = scmp.eq.s32.totalorder %s23, 0
      %p64 = por %p62, %p63
      %s66 = sadd.s32 %s65, 1
      %p69 = scmp.eq.s32.totalorder %s17, 3
      %p70 = scmp.ne.s32.totalorder %s65, %s67
      %p71 = scmp.eq.s32.totalorder %s17, 0
      %p72 = por %p70, %p71
      %p73 = scmp.ne.s32.totalorder %s65, %s67
      %p74 = scmp.eq.s32.totalorder %s22, 3
      %p75 = por %p73, %p74
      %p76 = scmp.ne.s32.totalorder %s67, %s68
      %p77 = scmp.eq.s32.totalorder %s22, 0
      %p78 = por %p76, %p77
      %p79 = scmp.ne.s32.totalorder %s67, %s68
      %p80 = scmp.eq.s32.totalorder %s23, 3
      %p81 = por %p79, %p80
      %p83 = scmp.ne.s32.totalorder %s68, %s82
      %p84 = scmp.eq.s32.totalorder %s23, 0
      %p85 = por %p83, %p84
      %s87 = sadd.s32 %s86, 1
      %p90 = scmp.eq.s32.totalorder %s17, 3
      %p91 = scmp.ne.s32.totalorder %s86, %s88
      %p92 = scmp.eq.s32.totalorder %s17, 0
      %p93 = por %p91, %p92
      %p94 = scmp.ne.s32.totalorder %s86, %s88
      %p95 = scmp.eq.s32.totalorder %s22, 3
      %p96 = por %p94, %p95
      %p97 = scmp.ne.s32.totalorder %s88, %s89
      %p98 = scmp.eq.s32.totalorder %s22, 0
      %p99 = por %p97, %p98
      %p100 = scmp.ne.s32.totalorder %s88, %s89
      %p101 = scmp.eq.s32.totalorder %s23, 3
      %p102 = por %p100, %p101
      %p104 = scmp.ne.s32.totalorder %s89, %s103
      %p105 = scmp.eq.s32.totalorder %s23, 0
      %p106 = por %p104, %p105
      %s108 = sadd.s32 %s107, 1
      %p111 = scmp.eq.s32.totalorder %s17, 3
      %p112 = scmp.ne.s32.totalorder %s107, %s109
      %p113 = scmp.eq.s32.totalorder %s17, 0
      %p114 = por %p112, %p113
      %p115 = scmp.ne.s32.totalorder %s107, %s109
      %p116 = scmp.eq.s32.totalorder %s22, 3
      %p117 = por %p115, %p116
      %p118 = scmp.ne.s32.totalorder %s109, %s110
      %p119 = scmp.eq.s32.totalorder %s22, 0
      %p120 = por %p118, %p119
      %p121 = scmp.ne.s32.totalorder %s109, %s110
      %p122 = scmp.eq.s32.totalorder %s23, 3
      %p123 = por %p121, %p122
      %p125 = scmp.ne.s32.totalorder %s110, %s124
      %p126 = scmp.eq.s32.totalorder %s23, 0
      %p127 = por %p125, %p126
      %s129 = sadd.s32 %s128, 1
      %p132 = scmp.eq.s32.totalorder %s17, 3
      %p133 = scmp.ne.s32.totalorder %s128, %s130
      %p134 = scmp.eq.s32.totalorder %s17, 0
      %p135 = por %p133, %p134
      %p136 = scmp.ne.s32.totalorder %s128, %s130
      %p137 = scmp.eq.s32.totalorder %s22, 3
      %p138 = por %p136, %p137
      %p139 = scmp.ne.s32.totalorder %s130, %s131
      %p140 = scmp.eq.s32.totalorder %s22, 0
      %p141 = por %p139, %p140
      %p142 = scmp.ne.s32.totalorder %s130, %s131
      %p143 = scmp.eq.s32.totalorder %s23, 3
      %p144 = por %p142, %p143
      %p146 = scmp.ne.s32.totalorder %s131, %s145
      %p147 = scmp.eq.s32.totalorder %s23, 0
      %p148 = por %p146, %p147
      %s149 = ssub.s32 %s24, %s36
      %s150 = ssub.s32 %s25, %s32
      %s151 = sor.u32 %s149, %s150
      %p152 = scmp.eq.s32.totalorder %s151, 0
      %s154 = sadd.s32 %s153, 1
      %s155 = scalar_select %p152, %s153, %s154
      %p158 = pneg %p152
      %p159 = scmp.eq.s32.totalorder %s17, 3
      %p160 = por %p158, %p159
      %p161 = scmp.ne.s32.totalorder %s153, %s156
      %p162 = scmp.eq.s32.totalorder %s17, 0
      %p163 = por %p161, %p162
      %p164 = scmp.ne.s32.totalorder %s153, %s156
      %p165 = scmp.eq.s32.totalorder %s22, 3
      %p166 = por %p164, %p165
      %p167 = scmp.ne.s32.totalorder %s156, %s157
      %p168 = scmp.eq.s32.totalorder %s22, 0
      %p169 = por %p167, %p168
      %p170 = scmp.ne.s32.totalorder %s156, %s157
      %p171 = scmp.eq.s32.totalorder %s23, 3
      %p172 = por %p170, %p171
      %p174 = scmp.ne.s32.totalorder %s157, %s173
      %p175 = scmp.eq.s32.totalorder %s23, 0
      %p176 = por %p174, %p175
      %s177 = ssub.s32 %s24, %s36
      %s178 = ssub.s32 %s25, %s32
      %s179 = sor.u32 %s177, %s178
      %p180 = scmp.eq.s32.totalorder %s179, 0
      %s182 = sadd.s32 %s181, 1
      %s183 = scalar_select %p180, %s181, %s182
      %p186 = pneg %p180
      %p187 = scmp.eq.s32.totalorder %s17, 3
      %p188 = por %p186, %p187
      %p189 = scmp.ne.s32.totalorder %s181, %s184
      %p190 = scmp.eq.s32.totalorder %s17, 0
      %p191 = por %p189, %p190
      %p192 = scmp.ne.s32.totalorder %s181, %s184
      %p193 = scmp.eq.s32.totalorder %s22, 3
      %p194 = por %p192, %p193
      %p195 = scmp.ne.s32.totalorder %s184, %s185
      %p196 = scmp.eq.s32.totalorder %s22, 0
      %p197 = por %p195, %p196
      %p198 = scmp.ne.s32.totalorder %s184, %s185
      %p199 = scmp.eq.s32.totalorder %s23, 3
      %p200 = por %p198, %p199
      %p202 = scmp.ne.s32.totalorder %s185, %s201
      %p203 = scmp.eq.s32.totalorder %s23, 0
      %p204 = por %p202, %p203
      %p205 = scmp.le.s32.totalorder 1, %s17
      %p206 = scmp.lt.s32.totalorder %s17, 5
      %p207 = pnand %p205, %p206
      %p208 = pneg %p207
      // Predicated region
      $region9: #{tpu_custom_call.1} parent=5 // pred_check
        _
      $region10: #{tpu_custom_call.1} parent=5 // pred_check_branch
        %210 = sbr.rel (%p207) target = $region12
      $region11: #{tpu_custom_call.1} parent=5 // pred_region
        %s211 = ssub.s32 %s17, 1
        // Predicated region
        $region13: #{tpu_custom_call.1} parent=11 // pred_check
          %p212 = pneg %p78
        $region14: #{tpu_custom_call.1} parent=11 // pred_check_branch
          %214 = sbr.rel (%p212) target = $region16
        $region15: #{tpu_custom_call.1} parent=11 // pred_region
          %s216 = ssub.s32 512, 512
          %217 = vsyncadd [#allocation5], %s216
          %s218 = sshll.u32 [#allocation4], 4
          %s219 = int_to_ptr.vmem [resolvable:$true] %s218
          %224 = dma.hbm_to_vmem [thread:$0]  %s1, 512, %s219, [#allocation5], 64, 64, 4
        $region16: #{tpu_custom_call.1} parent=11 // pred_fallthru
          _
        // Predicated region
        $region17: #{tpu_custom_call.1} parent=11 // pred_check
          %p225 = pneg %p99
        $region18: #{tpu_custom_call.1} parent=11 // pred_check_branch
          %227 = sbr.rel (%p225) target = $region20
        $region19: #{tpu_custom_call.1} parent=11 // pred_region
          _
        $region20: #{tpu_custom_call.1} parent=11 // pred_fallthru
          _
        // Predicated region
        $region21: #{tpu_custom_call.1} parent=11 // pred_check
          %p228 = pneg %p120
        $region22: #{tpu_custom_call.1} parent=11 // pred_check_branch
          %230 = sbr.rel (%p228) target = $region24
        $region23: #{tpu_custom_call.1} parent=11 // pred_region
          %s232 = ssub.s32 512, 512
          %233 = vsyncadd [#allocation5], %s232
          %s234 = sshll.u32 [#allocation6], 4
          %s235 = int_to_ptr.vmem [resolvable:$true] %s234
          %240 = dma.hbm_to_vmem [thread:$0]  %s3, 512, %s235, [#allocation5], 64, 64, 4
        $region24: #{tpu_custom_call.1} parent=11 // pred_fallthru
          _
        // Predicated region
        $region25: #{tpu_custom_call.1} parent=11 // pred_check
          %p241 = pneg %p141
        $region26: #{tpu_custom_call.1} parent=11 // pred_check_branch
          %243 = sbr.rel (%p241) target = $region28
        $region27: #{tpu_custom_call.1} parent=11 // pred_region
          _
        $region28: #{tpu_custom_call.1} parent=11 // pred_fallthru
          _
      $region12: #{tpu_custom_call.1} parent=5 // pred_fallthru
        _
      %p244 = scmp.lt.s32.totalorder %s17, 4
      // Predicated region
      $region29: #{tpu_custom_call.1} parent=5 // pred_check
        %p245 = pneg %p244
      $region30: #{tpu_custom_call.1} parent=5 // pred_check_branch
        %247 = sbr.rel (%p245) target = $region32
      $region31: #{tpu_custom_call.1} parent=5 // pred_region
        // Predicated region
        $region33: #{tpu_custom_call.1} parent=31 // pred_check
          %p248 = pneg %p51
        $region34: #{tpu_custom_call.1} parent=31 // pred_check_branch
          %250 = sbr.rel (%p248) target = $region36
        $region35: #{tpu_custom_call.1} parent=31 // pred_region
          %s251 = sand.u32 %s41, 1
          %s252 = scalar_lea.sflag [#allocation3], %s251
          %s253 = sand.u32 %s41, 1
          %s254 = smul.addr %s253, 256
          %s255 = scalar_lea.vmem [#allocation2], %s254
          %s256 = smul.u32 4, %s25
          %s258 = ssub.s32 4096, 4096
          %259 = vsyncadd %s252, %s258
          %s260 = smul.addr %s24, 64
          %s261 = sadd.s32 %s256, %s260
          %s262 = smul.addr %s261, 128
          %s263 = scalar_lea.hbm %s0, %s262
          %s264 = sshll.u32 %s255, 4
          %s265 = int_to_ptr.vmem [resolvable:$true] %s264
          %270 = dma.hbm_to_vmem [thread:$0]  %s263, 4096, %s265, %s252, 1024, 512, 32
        $region36: #{tpu_custom_call.1} parent=31 // pred_fallthru
          _
      $region32: #{tpu_custom_call.1} parent=5 // pred_fallthru
        _
      %p271 = scmp.le.s32.totalorder 1, %s17
      %p272 = scmp.lt.s32.totalorder %s17, 5
      %p273 = pnand %p271, %p272
      %p274 = pneg %p273
      // Predicated region
      $region37: #{tpu_custom_call.1} parent=5 // pred_check
        _
      $region38: #{tpu_custom_call.1} parent=5 // pred_check_branch
        %276 = sbr.rel (%p273) target = $region40
      $region39: #{tpu_custom_call.1} parent=5 // pred_region
        %s277 = ssub.s32 %s17, 1
        %s278 = sand.u32 %s44, 1
        %s279 = scalar_lea.sflag [#allocation3], %s278
        %s280 = sand.u32 %s44, 1
        %s281 = smul.addr %s280, 256
        %s282 = scalar_lea.vmem [#allocation2], %s281
        // Predicated region
        $region41: #{tpu_custom_call.1} parent=39 // pred_check
          %p283 = pneg %p57
        $region42: #{tpu_custom_call.1} parent=39 // pred_check_branch
          %285 = sbr.rel (%p283) target = $region44
        $region43: #{tpu_custom_call.1} parent=39 // pred_region
          %286 = dma.done %s279, 4096
        $region44: #{tpu_custom_call.1} parent=39 // pred_fallthru
          _
        // Predicated region
        $region45: #{tpu_custom_call.1} parent=39 // pred_check
          %p287 = pneg %p78
        $region46: #{tpu_custom_call.1} parent=39 // pred_check_branch
          %289 = sbr.rel (%p287) target = $region48
        $region47: #{tpu_custom_call.1} parent=39 // pred_region
          %290 = dma.done [#allocation5], 512
        $region48: #{tpu_custom_call.1} parent=39 // pred_fallthru
          _
        // Predicated region
        $region49: #{tpu_custom_call.1} parent=39 // pred_check
          %p291 = pneg %p120
        $region50: #{tpu_custom_call.1} parent=39 // pred_check_branch
          %293 = sbr.rel (%p291) target = $region52
        $region51: #{tpu_custom_call.1} parent=39 // pred_region
          %294 = dma.done [#allocation5], 512
        $region52: #{tpu_custom_call.1} parent=39 // pred_fallthru
          _
        %s295 = sand.u32 %s44, 1
        %s296 = scalar_lea.sflag [#allocation3], %s295
        %s297 = sand.u32 %s44, 1
        %s298 = smul.addr %s297, 256
        %s299 = scalar_lea.vmem [#allocation2], %s298
        %p300 = pneg %p57
        %p301 = pneg %p54
        %p302 = pneg %p78
        %p303 = pneg %p75
        %p304 = pneg %p99
        %p305 = pneg %p96
        %p306 = pneg %p120
        %p307 = pneg %p117
        %p308 = pneg %p141
        %p309 = pneg %p138
        %p310 = pneg %p169
        %p311 = pneg %p166
        %s312 = smul.u32 64, %s27
        %p313 = scmp.lt.s32.totalorder %s26, 1
        %s314 = scalar_select %p313, %s26, 1
        %p315 = scmp.lt.s32.totalorder %s312, 127
        %s316 = scalar_select %p315, %s312, 127
        %s317 = smul.addr %s314, 128
        %s318 = sadd.s32 %s316, %s317
        %s319 = smul.addr %s318, 4
        %s320 = scalar_lea.vmem %s5, %s319
        %p321 = pneg %p197
        %p322 = pneg %p194
        %s323 = smul.u32 64, %s27
        %p324 = scmp.lt.s32.totalorder %s26, 1
        %s325 = scalar_select %p324, %s26, 1
        %p326 = scmp.lt.s32.totalorder %s323, 127
        %s327 = scalar_select %p326, %s323, 127
        %s328 = smul.addr %s325, 128
        %s329 = sadd.s32 %s327, %s328
        %s330 = smul.addr %s329, 4
        %s331 = scalar_lea.vmem %s6, %s330
        %s332 = smul.u32 4, %s27
        %s333 = smul.u32 64, %s27
        %p334 = scmp.lt.s32.totalorder %s26, 1
        %s335 = scalar_select %p334, %s26, 1
        %p336 = scmp.lt.s32.totalorder %s333, 127
        %s337 = scalar_select %p336, %s333, 127
        %s338 = smul.addr %s335, 128
        %s339 = sadd.s32 %s337, %s338
        %s340 = smul.addr %s339, 4
        %s341 = scalar_lea.vmem %s5, %s340
        %s342 = smul.u32 64, %s27
        %s343 = smul.u32 64, %s27
        %p344 = scmp.lt.s32.totalorder %s26, 1
        %s345 = scalar_select %p344, %s26, 1
        %p346 = scmp.lt.s32.totalorder %s343, 127
        %s347 = scalar_select %p346, %s343, 127
        %s348 = smul.addr %s345, 128
        %s349 = sadd.s32 %s347, %s348
        %s350 = smul.addr %s349, 4
        %s351 = scalar_lea.vmem %s6, %s350
        %s352 = smul.u32 64, %s27
        %v354 = vld [vmem:[%s282] sm:$0xff]
        %v355 = vld [vmem:[%s282 + $0x8] sm:$0xff]
        %v356 = vld [vmem:[%s282 + $0x10] sm:$0xff]
        %v357 = vld [vmem:[%s282 + $0x18] sm:$0xff]
        %v358 = vld [vmem:[%s282 + $0x20] sm:$0xff]
        %v359 = vld [vmem:[%s282 + $0x28] sm:$0xff]
        %v360 = vld [vmem:[%s282 + $0x30] sm:$0xff]
        %v361 = vld [vmem:[%s282 + $0x38] sm:$0xff]
        %v362 = vld [vmem:[%s282 + $0x40] sm:$0xff]
        %v363 = vld [vmem:[%s282 + $0x48] sm:$0xff]
        %v364 = vld [vmem:[%s282 + $0x50] sm:$0xff]
        %v365 = vld [vmem:[%s282 + $0x58] sm:$0xff]
        %v366 = vld [vmem:[%s282 + $0x60] sm:$0xff]
        %v367 = vld [vmem:[%s282 + $0x68] sm:$0xff]
        %v368 = vld [vmem:[%s282 + $0x70] sm:$0xff]
        %v369 = vld [vmem:[%s282 + $0x78] sm:$0xff]
        %v370 = vld [vmem:[%s282 + $0x80] sm:$0xff]
        %v371 = vld [vmem:[%s282 + $0x88] sm:$0xff]
        %v372 = vld [vmem:[%s282 + $0x90] sm:$0xff]
        %v373 = vld [vmem:[%s282 + $0x98] sm:$0xff]
        %v374 = vld [vmem:[%s282 + $0xa0] sm:$0xff]
        %v375 = vld [vmem:[%s282 + $0xa8] sm:$0xff]
        %v376 = vld [vmem:[%s282 + $0xb0] sm:$0xff]
        %v377 = vld [vmem:[%s282 + $0xb8] sm:$0xff]
        %v378 = vld [vmem:[%s282 + $0xc0] sm:$0xff]
        %v379 = vld [vmem:[%s282 + $0xc8] sm:$0xff]
        %v380 = vld [vmem:[%s282 + $0xd0] sm:$0xff]
        %v381 = vld [vmem:[%s282 + $0xd8] sm:$0xff]
        %v382 = vld [vmem:[%s282 + $0xe0] sm:$0xff]
        %v383 = vld [vmem:[%s282 + $0xe8] sm:$0xff]
        %v384 = vld [vmem:[%s282 + $0xf0] sm:$0xff]
        %v385 = vld [vmem:[%s282 + $0xf8] sm:$0xff]
        %386 = vxpose.xlu0.b32.start [1/16] %v354, 128
        %387 = vxpose.xlu0.b32.cont [2/16] %v358, 128
        %388 = vxpose.xlu0.b32.cont [3/16] %v362, 128
        %389 = vxpose.xlu0.b32.cont [4/16] %v366, 128
        %390 = vxpose.xlu0.b32.cont [5/16] %v370, 128
        %391 = vxpose.xlu0.b32.cont [6/16] %v374, 128
        %392 = vxpose.xlu0.b32.cont [7/16] %v378, 128
        %393 = vxpose.xlu0.b32.cont [8/16] %v382, 128
        %394 = vxpose.xlu0.b32.cont [9/16] 0.0, 128
        %395 = vxpose.xlu0.b32.cont [10/16] 0.0, 128
        %396 = vxpose.xlu0.b32.cont [11/16] 0.0, 128
        %397 = vxpose.xlu0.b32.cont [12/16] 0.0, 128
        %398 = vxpose.xlu0.b32.cont [13/16] 0.0, 128
        %399 = vxpose.xlu0.b32.cont [14/16] 0.0, 128
        %400 = vxpose.xlu0.b32.cont [15/16] 0.0, 128
        %401 = vxpose.xlu0.b32.end [16/16] 0.0, 128
        %v402 = vpop.trf.xlu0
        %v403 = vpop.trf.xlu0
        %v404 = vpop.trf.xlu0
        %v405 = vpop.trf.xlu0
        %v406 = vpop.trf.xlu0
        %v407 = vpop.trf.xlu0
        %v408 = vpop.trf.xlu0
        %v409 = vpop.trf.xlu0
        %v410 = vpop.trf.xlu0
        %v411 = vpop.trf.xlu0
        %v412 = vpop.trf.xlu0
        %v413 = vpop.trf.xlu0
        %v414 = vpop.trf.xlu0
        %v415 = vpop.trf.xlu0
        %v416 = vpop.trf.xlu0
        %v417 = vpop.trf.xlu0
        %418 = vxpose.xlu0.b32.start [1/16] %v355, 128
        %419 = vxpose.xlu0.b32.cont [2/16] %v359, 128
        %420 = vxpose.xlu0.b32.cont [3/16] %v363, 128
        %421 = vxpose.xlu0.b32.cont [4/16] %v367, 128
        %422 = vxpose.xlu0.b32.cont [5/16] %v371, 128
        %423 = vxpose.xlu0.b32.cont [6/16] %v375, 128
        %424 = vxpose.xlu0.b32.cont [7/16] %v379, 128
        %425 = vxpose.xlu0.b32.cont [8/16] %v383, 128
        %426 = vxpose.xlu0.b32.cont [9/16] 0.0, 128
        %427 = vxpose.xlu0.b32.cont [10/16] 0.0, 128
        %428 = vxpose.xlu0.b32.cont [11/16] 0.0, 128
        %429 = vxpose.xlu0.b32.cont [12/16] 0.0, 128
        %430 = vxpose.xlu0.b32.cont [13/16] 0.0, 128
        %431 = vxpose.xlu0.b32.cont [14/16] 0.0, 128
        %432 = vxpose.xlu0.b32.cont [15/16] 0.0, 128
        %433 = vxpose.xlu0.b32.end [16/16] 0.0, 128
        %v434 = vpop.trf.xlu0
        %v435 = vpop.trf.xlu0
        %v436 = vpop.trf.xlu0
        %v437 = vpop.trf.xlu0
        %v438 = vpop.trf.xlu0
        %v439 = vpop.trf.xlu0
        %v440 = vpop.trf.xlu0
        %v441 = vpop.trf.xlu0
        %v442 = vpop.trf.xlu0
        %v443 = vpop.trf.xlu0
        %v444 = vpop.trf.xlu0
        %v445 = vpop.trf.xlu0
        %v446 = vpop.trf.xlu0
        %v447 = vpop.trf.xlu0
        %v448 = vpop.trf.xlu0
        %v449 = vpop.trf.xlu0
        %450 = vxpose.xlu0.b32.start [1/16] %v356, 128
        %451 = vxpose.xlu0.b32.cont [2/16] %v360, 128
        %452 = vxpose.xlu0.b32.cont [3/16] %v364, 128
        %453 = vxpose.xlu0.b32.cont [4/16] %v368, 128
        %454 = vxpose.xlu0.b32.cont [5/16] %v372, 128
        %455 = vxpose.xlu0.b32.cont [6/16] %v376, 128
        %456 = vxpose.xlu0.b32.cont [7/16] %v380, 128
        %457 = vxpose.xlu0.b32.cont [8/16] %v384, 128
        %458 = vxpose.xlu0.b32.cont [9/16] 0.0, 128
        %459 = vxpose.xlu0.b32.cont [10/16] 0.0, 128
        %460 = vxpose.xlu0.b32.cont [11/16] 0.0, 128
        %461 = vxpose.xlu0.b32.cont [12/16] 0.0, 128
        %462 = vxpose.xlu0.b32.cont [13/16] 0.0, 128
        %463 = vxpose.xlu0.b32.cont [14/16] 0.0, 128
        %464 = vxpose.xlu0.b32.cont [15/16] 0.0, 128
        %465 = vxpose.xlu0.b32.end [16/16] 0.0, 128
        %v466 = vpop.trf.xlu0
        %v467 = vpop.trf.xlu0
        %v468 = vpop.trf.xlu0
        %v469 = vpop.trf.xlu0
        %v470 = vpop.trf.xlu0
        %v471 = vpop.trf.xlu0
        %v472 = vpop.trf.xlu0
        %v473 = vpop.trf.xlu0
        %v474 = vpop.trf.xlu0
        %v475 = vpop.trf.xlu0
        %v476 = vpop.trf.xlu0
        %v477 = vpop.trf.xlu0
        %v478 = vpop.trf.xlu0
        %v479 = vpop.trf.xlu0
        %v480 = vpop.trf.xlu0
        %v481 = vpop.trf.xlu0
        %482 = vxpose.xlu0.b32.start [1/16] %v357, 128
        %483 = vxpose.xlu0.b32.cont [2/16] %v361, 128
        %484 = vxpose.xlu0.b32.cont [3/16] %v365, 128
        %485 = vxpose.xlu0.b32.cont [4/16] %v369, 128
        %486 = vxpose.xlu0.b32.cont [5/16] %v373, 128
        %487 = vxpose.xlu0.b32.cont [6/16] %v377, 128
        %488 = vxpose.xlu0.b32.cont [7/16] %v381, 128
        %489 = vxpose.xlu0.b32.cont [8/16] %v385, 128
        %490 = vxpose.xlu0.b32.cont [9/16] 0.0, 128
        %491 = vxpose.xlu0.b32.cont [10/16] 0.0, 128
        %492 = vxpose.xlu0.b32.cont [11/16] 0.0, 128
        %493 = vxpose.xlu0.b32.cont [12/16] 0.0, 128
        %494 = vxpose.xlu0.b32.cont [13/16] 0.0, 128
        %495 = vxpose.xlu0.b32.cont [14/16] 0.0, 128
        %496 = vxpose.xlu0.b32.cont [15/16] 0.0, 128
        %497 = vxpose.xlu0.b32.end [16/16] 0.0, 128
        %v498 = vpop.trf.xlu0
        %v499 = vpop.trf.xlu0
        %v500 = vpop.trf.xlu0
        %v501 = vpop.trf.xlu0
        %v502 = vpop.trf.xlu0
        %v503 = vpop.trf.xlu0
        %v504 = vpop.trf.xlu0
        %v505 = vpop.trf.xlu0
        %v506 = vpop.trf.xlu0
        %v507 = vpop.trf.xlu0
        %v508 = vpop.trf.xlu0
        %v509 = vpop.trf.xlu0
        %v510 = vpop.trf.xlu0
        %v511 = vpop.trf.xlu0
        %v512 = vpop.trf.xlu0
        %v513 = vpop.trf.xlu0
        %v514 = vpack.c.bf16 %v403, %v402
        %v515 = vpack.c.bf16 %v405, %v404
        %v516 = vpack.c.bf16 %v407, %v406
        %v517 = vpack.c.bf16 %v409, %v408
        %v518 = vpack.c.bf16 %v411, %v410
        %v519 = vpack.c.bf16 %v413, %v412
        %v520 = vpack.c.bf16 %v415, %v414
        %v521 = vpack.c.bf16 %v417, %v416
        %v522 = vpack.c.bf16 %v435, %v434
        %v523 = vpack.c.bf16 %v437, %v436
        %v524 = vpack.c.bf16 %v439, %v438
        %v525 = vpack.c.bf16 %v441, %v440
        %v526 = vpack.c.bf16 %v443, %v442
        %v527 = vpack.c.bf16 %v445, %v444
        %v528 = vpack.c.bf16 %v447, %v446
        %v529 = vpack.c.bf16 %v449, %v448
        %v530 = vpack.c.bf16 %v467, %v466
        %v531 = vpack.c.bf16 %v469, %v468
        %v532 = vpack.c.bf16 %v471, %v470
        %v533 = vpack.c.bf16 %v473, %v472
        %v534 = vpack.c.bf16 %v475, %v474
        %v535 = vpack.c.bf16 %v477, %v476
        %v536 = vpack.c.bf16 %v479, %v478
        %v537 = vpack.c.bf16 %v481, %v480
        %v538 = vpack.c.bf16 %v499, %v498
        %v539 = vpack.c.bf16 %v501, %v500
        %v540 = vpack.c.bf16 %v503, %v502
        %v541 = vpack.c.bf16 %v505, %v504
        %v542 = vpack.c.bf16 %v507, %v506
        %v543 = vpack.c.bf16 %v509, %v508
        %v544 = vpack.c.bf16 %v511, %v510
        %v545 = vpack.c.bf16 %v513, %v512
        %v546 = vld [vmem:[#allocation4] sm:$0xf]
        %v547 = vld [vmem:[#allocation4 + $0x4] sm:$0xf]
        %v548 = vld [vmem:[#allocation4 + $0x8] sm:$0xf]
        %v549 = vld [vmem:[#allocation4 + $0xc] sm:$0xf]
        %v550 = vld [vmem:[#allocation4 + $0x10] sm:$0xf]
        %v551 = vld [vmem:[#allocation4 + $0x14] sm:$0xf]
        %v552 = vld [vmem:[#allocation4 + $0x18] sm:$0xf]
        %v553 = vld [vmem:[#allocation4 + $0x1c] sm:$0xf]
        %v554 = vld [vmem:[%s2] sm:$0x1]
        %v556 = vlaneseq
        %v557 = vshrl.u32 %v556, 7
        %v558 = vsub.s32 0, %v557
        %v559 = vrot.slane %v554, %v558
        %v569 = vunpack.c.l.b16 %v546
        %v570 = vunpack.c.l.b16 %v547
        %v571 = vunpack.c.l.b16 %v548
        %v572 = vunpack.c.l.b16 %v549
        %v573 = vunpack.c.l.b16 %v550
        %v574 = vunpack.c.l.b16 %v551
        %v575 = vunpack.c.l.b16 %v552
        %v576 = vunpack.c.l.b16 %v553
        %v577 = vpack.c.b16 %v570, %v569
        %v578 = vpack.c.b16 %v572, %v571
        %v579 = vpack.c.b16 %v574, %v573
        %v580 = vpack.c.b16 %v576, %v575
        %vm585 = vcmask 523264
        %v587 = vsel %vm585, %v514, 0
        %v590 = vsel %vm585, %v515, 0
        %v593 = vsel %vm585, %v516, 0
        %v596 = vsel %vm585, %v517, 0
        %v599 = vsel %vm585, %v518, 0
        %v602 = vsel %vm585, %v519, 0
        %v605 = vsel %vm585, %v520, 0
        %v608 = vsel %vm585, %v521, 0
        %v611 = vsel %vm585, %v522, 0
        %v614 = vsel %vm585, %v523, 0
        %v617 = vsel %vm585, %v524, 0
        %v620 = vsel %vm585, %v525, 0
        %v623 = vsel %vm585, %v526, 0
        %v626 = vsel %vm585, %v527, 0
        %v629 = vsel %vm585, %v528, 0
        %v632 = vsel %vm585, %v529, 0
        %v635 = vsel %vm585, %v530, 0
        %v638 = vsel %vm585, %v531, 0
        %v641 = vsel %vm585, %v532, 0
        %v644 = vsel %vm585, %v533, 0
        %v647 = vsel %vm585, %v534, 0
        %v650 = vsel %vm585, %v535, 0
        %v653 = vsel %vm585, %v536, 0
        %v656 = vsel %vm585, %v537, 0
        %v659 = vsel %vm585, %v538, 0
        %v662 = vsel %vm585, %v539, 0
        %v665 = vsel %vm585, %v540, 0
        %v668 = vsel %vm585, %v541, 0
        %v671 = vsel %vm585, %v542, 0
        %v674 = vsel %vm585, %v543, 0
        %v677 = vsel %vm585, %v544, 0
        %v680 = vsel %vm585, %v545, 0
        %682 = vmatprep.subr.bf16.mxu0 0
        %683 = vmatpush1.bf16.msra.mxu0 0
        %684 = vmatprep.subr.bf16.mxu0 0
        %685 = vmatpush1.bf16.msra.mxu0 0
        %686 = vmatprep.subr.bf16.mxu0 0
        %687 = vmatpush1.bf16.msra.mxu0 0
        %688 = vmatprep.subr.bf16.mxu0 0
        %689 = vmatpush1.bf16.msra.mxu0 0
        %690 = vmatprep.subr.bf16.mxu0 0
        %691 = vmatpush1.bf16.msra.mxu0 %v580
        %692 = vmatprep.subr.bf16.mxu0 0
        %693 = vmatpush1.bf16.msra.mxu0 %v579
        %694 = vmatprep.subr.bf16.mxu0 0
        %695 = vmatpush1.bf16.msra.mxu0 %v578
        %696 = vmatprep.subr.bf16.mxu0 0
        %697 = vmatpush1.bf16.msra.mxu0 %v577
        %698 = vmatprep.subr.bf16.mxu0 0
        %699 = vmatpush2.bf16.msra.mxu0 0
        %700 = vmatprep.subr.bf16.mxu0 0
        %701 = vmatpush2.bf16.msra.mxu0 0
        %702 = vmatprep.subr.bf16.mxu0 0
        %703 = vmatpush2.bf16.msra.mxu0 0
        %704 = vmatprep.subr.bf16.mxu0 0
        %705 = vmatpush2.bf16.msra.mxu0 0
        %706 = vmatprep.subr.bf16.mxu0 0
        %707 = vmatpush2.bf16.msra.mxu0 0
        %708 = vmatprep.subr.bf16.mxu0 0
        %709 = vmatpush2.bf16.msra.mxu0 0
        %710 = vmatprep.subr.bf16.mxu0 0
        %711 = vmatpush2.bf16.msra.mxu0 0
        %712 = vmatprep.subr.bf16.mxu0 0
        %713 = vmatpush2.bf16.msra.mxu0 0
        %714 = vmatprep.mubr.bf16.mxu0 0
        %715 = vmatmul.mubr.bf16.gmra.mxu0 %v587
        %v716 = vpop.f32.mrf.mxu0
        %v717 = vadd.f32 %v559, %v716
        %v718 = vpop.f32.mrf.mxu0
        %v719 = vpop.f32.mrf.mxu0
        %v720 = vadd.f32 %v559, %v719
        %v721 = vpop.f32.mrf.mxu0
        %722 = vmatprep.mubr.bf16.mxu0 0
        %723 = vmatmul.mubr.bf16.gmra.mxu0 %v590
        %v724 = vpop.f32.mrf.mxu0
        %v725 = vadd.f32 %v559, %v724
        %v726 = vpop.f32.mrf.mxu0
        %v727 = vpop.f32.mrf.mxu0
        %v728 = vadd.f32 %v559, %v727
        %v729 = vpop.f32.mrf.mxu0
        %730 = vmatprep.mubr.bf16.mxu0 0
        %731 = vmatmul.mubr.bf16.gmra.mxu0 %v593
        %v732 = vpop.f32.mrf.mxu0
        %v733 = vadd.f32 %v559, %v732
        %v734 = vpop.f32.mrf.mxu0
        %v735 = vpop.f32.mrf.mxu0
        %v736 = vadd.f32 %v559, %v735
        %v737 = vpop.f32.mrf.mxu0
        %738 = vmatprep.mubr.bf16.mxu0 0
        %739 = vmatmul.mubr.bf16.gmra.mxu0 %v596
        %v740 = vpop.f32.mrf.mxu0
        %v741 = vadd.f32 %v559, %v740
        %v742 = vpop.f32.mrf.mxu0
        %v743 = vpop.f32.mrf.mxu0
        %v744 = vadd.f32 %v559, %v743
        %v745 = vpop.f32.mrf.mxu0
        %746 = vmatprep.mubr.bf16.mxu0 0
        %747 = vmatmul.mubr.bf16.gmra.mxu0 %v599
        %v748 = vpop.f32.mrf.mxu0
        %v749 = vadd.f32 %v559, %v748
        %v750 = vpop.f32.mrf.mxu0
        %v751 = vpop.f32.mrf.mxu0
        %v752 = vadd.f32 %v559, %v751
        %v753 = vpop.f32.mrf.mxu0
        %754 = vmatprep.mubr.bf16.mxu0 0
        %755 = vmatmul.mubr.bf16.gmra.mxu0 %v602
        %v756 = vpop.f32.mrf.mxu0
        %v757 = vadd.f32 %v559, %v756
        %v758 = vpop.f32.mrf.mxu0
        %v759 = vpop.f32.mrf.mxu0
        %v760 = vadd.f32 %v559, %v759
        %v761 = vpop.f32.mrf.mxu0
        %762 = vmatprep.mubr.bf16.mxu0 0
        %763 = vmatmul.mubr.bf16.gmra.mxu0 %v605
        %v764 = vpop.f32.mrf.mxu0
        %v765 = vadd.f32 %v559, %v764
        %v766 = vpop.f32.mrf.mxu0
        %v767 = vpop.f32.mrf.mxu0
        %v768 = vadd.f32 %v559, %v767
        %v769 = vpop.f32.mrf.mxu0
        %770 = vmatprep.mubr.bf16.mxu0 0
        %771 = vmatmul.mubr.bf16.gmra.mxu0 %v608
        %v772 = vpop.f32.mrf.mxu0
        %v773 = vadd.f32 %v559, %v772
        %v774 = vpop.f32.mrf.mxu0
        %v775 = vpop.f32.mrf.mxu0
        %v776 = vadd.f32 %v559, %v775
        %v777 = vpop.f32.mrf.mxu0
        %778 = vmatprep.mubr.bf16.mxu0 0
        %779 = vmatmul.mubr.bf16.gmra.mxu0 %v611
        %v780 = vpop.f32.mrf.mxu0
        %v781 = vadd.f32 %v559, %v780
        %v782 = vpop.f32.mrf.mxu0
        %v783 = vpop.f32.mrf.mxu0
        %v784 = vadd.f32 %v559, %v783
        %v785 = vpop.f32.mrf.mxu0
        %786 = vmatprep.mubr.bf16.mxu0 0
        %787 = vmatmul.mubr.bf16.gmra.mxu0 %v614
        %v788 = vpop.f32.mrf.mxu0
        %v789 = vadd.f32 %v559, %v788
        %v790 = vpop.f32.mrf.mxu0
        %v791 = vpop.f32.mrf.mxu0
        %v792 = vadd.f32 %v559, %v791
        %v793 = vpop.f32.mrf.mxu0
        %794 = vmatprep.mubr.bf16.mxu0 0
        %795 = vmatmul.mubr.bf16.gmra.mxu0 %v617
        %v796 = vpop.f32.mrf.mxu0
        %v797 = vadd.f32 %v559, %v796
        %v798 = vpop.f32.mrf.mxu0
        %v799 = vpop.f32.mrf.mxu0
        %v800 = vadd.f32 %v559, %v799
        %v801 = vpop.f32.mrf.mxu0
        %802 = vmatprep.mubr.bf16.mxu0 0
        %803 = vmatmul.mubr.bf16.gmra.mxu0 %v620
        %v804 = vpop.f32.mrf.mxu0
        %v805 = vadd.f32 %v559, %v804
        %v806 = vpop.f32.mrf.mxu0
        %v807 = vpop.f32.mrf.mxu0
        %v808 = vadd.f32 %v559, %v807
        %v809 = vpop.f32.mrf.mxu0
        %810 = vmatprep.mubr.bf16.mxu0 0
        %811 = vmatmul.mubr.bf16.gmra.mxu0 %v623
        %v812 = vpop.f32.mrf.mxu0
        %v813 = vadd.f32 %v559, %v812
        %v814 = vpop.f32.mrf.mxu0
        %v815 = vpop.f32.mrf.mxu0
        %v816 = vadd.f32 %v559, %v815
        %v817 = vpop.f32.mrf.mxu0
        %818 = vmatprep.mubr.bf16.mxu0 0
        %819 = vmatmul.mubr.bf16.gmra.mxu0 %v626
        %v820 = vpop.f32.mrf.mxu0
        %v821 = vadd.f32 %v559, %v820
        %v822 = vpop.f32.mrf.mxu0
        %v823 = vpop.f32.mrf.mxu0
        %v824 = vadd.f32 %v559, %v823
        %v825 = vpop.f32.mrf.mxu0
        %826 = vmatprep.mubr.bf16.mxu0 0
        %827 = vmatmul.mubr.bf16.gmra.mxu0 %v629
        %v828 = vpop.f32.mrf.mxu0
        %v829 = vadd.f32 %v559, %v828
        %v830 = vpop.f32.mrf.mxu0
        %v831 = vpop.f32.mrf.mxu0
        %v832 = vadd.f32 %v559, %v831
        %v833 = vpop.f32.mrf.mxu0
        %834 = vmatprep.mubr.bf16.mxu0 0
        %835 = vmatmul.mubr.bf16.gmra.mxu0 %v632
        %v836 = vpop.f32.mrf.mxu0
        %v837 = vadd.f32 %v559, %v836
        %v838 = vpop.f32.mrf.mxu0
        %v839 = vpop.f32.mrf.mxu0
        %v840 = vadd.f32 %v559, %v839
        %v841 = vpop.f32.mrf.mxu0
        %842 = vmatprep.mubr.bf16.mxu0 0
        %843 = vmatmul.mubr.bf16.gmra.mxu0 %v635
        %v844 = vpop.f32.mrf.mxu0
        %v845 = vadd.f32 %v559, %v844
        %v846 = vpop.f32.mrf.mxu0
        %v847 = vpop.f32.mrf.mxu0
        %v848 = vadd.f32 %v559, %v847
        %v849 = vpop.f32.mrf.mxu0
        %850 = vmatprep.mubr.bf16.mxu0 0
        %851 = vmatmul.mubr.bf16.gmra.mxu0 %v638
        %v852 = vpop.f32.mrf.mxu0
        %v853 = vadd.f32 %v559, %v852
        %v854 = vpop.f32.mrf.mxu0
        %v855 = vpop.f32.mrf.mxu0
        %v856 = vadd.f32 %v559, %v855
        %v857 = vpop.f32.mrf.mxu0
        %858 = vmatprep.mubr.bf16.mxu0 0
        %859 = vmatmul.mubr.bf16.gmra.mxu0 %v641
        %v860 = vpop.f32.mrf.mxu0
        %v861 = vadd.f32 %v559, %v860
        %v862 = vpop.f32.mrf.mxu0
        %v863 = vpop.f32.mrf.mxu0
        %v864 = vadd.f32 %v559, %v863
        %v865 = vpop.f32.mrf.mxu0
        %866 = vmatprep.mubr.bf16.mxu0 0
        %867 = vmatmul.mubr.bf16.gmra.mxu0 %v644
        %v868 = vpop.f32.mrf.mxu0
        %v869 = vadd.f32 %v559, %v868
        %v870 = vpop.f32.mrf.mxu0
        %v871 = vpop.f32.mrf.mxu0
        %v872 = vadd.f32 %v559, %v871
        %v873 = vpop.f32.mrf.mxu0
        %874 = vmatprep.mubr.bf16.mxu0 0
        %875 = vmatmul.mubr.bf16.gmra.mxu0 %v647
        %v876 = vpop.f32.mrf.mxu0
        %v877 = vadd.f32 %v559, %v876
        %v878 = vpop.f32.mrf.mxu0
        %v879 = vpop.f32.mrf.mxu0
        %v880 = vadd.f32 %v559, %v879
        %v881 = vpop.f32.mrf.mxu0
        %882 = vmatprep.mubr.bf16.mxu0 0
        %883 = vmatmul.mubr.bf16.gmra.mxu0 %v650
        %v884 = vpop.f32.mrf.mxu0
        %v885 = vadd.f32 %v559, %v884
        %v886 = vpop.f32.mrf.mxu0
        %v887 = vpop.f32.mrf.mxu0
        %v888 = vadd.f32 %v559, %v887
        %v889 = vpop.f32.mrf.mxu0
        %890 = vmatprep.mubr.bf16.mxu0 0
        %891 = vmatmul.mubr.bf16.gmra.mxu0 %v653
        %v892 = vpop.f32.mrf.mxu0
        %v893 = vadd.f32 %v559, %v892
        %v894 = vpop.f32.mrf.mxu0
        %v895 = vpop.f32.mrf.mxu0
        %v896 = vadd.f32 %v559, %v895
        %v897 = vpop.f32.mrf.mxu0
        %898 = vmatprep.mubr.bf16.mxu0 0
        %899 = vmatmul.mubr.bf16.gmra.mxu0 %v656
        %v900 = vpop.f32.mrf.mxu0
        %v901 = vadd.f32 %v559, %v900
        %v902 = vpop.f32.mrf.mxu0
        %v903 = vpop.f32.mrf.mxu0
        %v904 = vadd.f32 %v559, %v903
        %v905 = vpop.f32.mrf.mxu0
        %906 = vmatprep.mubr.bf16.mxu0 0
        %907 = vmatmul.mubr.bf16.gmra.mxu0 %v659
        %v908 = vpop.f32.mrf.mxu0
        %v909 = vadd.f32 %v559, %v908
        %v910 = vpop.f32.mrf.mxu0
        %v911 = vpop.f32.mrf.mxu0
        %v912 = vadd.f32 %v559, %v911
        %v913 = vpop.f32.mrf.mxu0
        %914 = vmatprep.mubr.bf16.mxu0 0
        %915 = vmatmul.mubr.bf16.gmra.mxu0 %v662
        %v916 = vpop.f32.mrf.mxu0
        %v917 = vadd.f32 %v559, %v916
        %v918 = vpop.f32.mrf.mxu0
        %v919 = vpop.f32.mrf.mxu0
        %v920 = vadd.f32 %v559, %v919
        %v921 = vpop.f32.mrf.mxu0
        %922 = vmatprep.mubr.bf16.mxu0 0
        %923 = vmatmul.mubr.bf16.gmra.mxu0 %v665
        %v924 = vpop.f32.mrf.mxu0
        %v925 = vadd.f32 %v559, %v924
        %v926 = vpop.f32.mrf.mxu0
        %v927 = vpop.f32.mrf.mxu0
        %v928 = vadd.f32 %v559, %v927
        %v929 = vpop.f32.mrf.mxu0
        %930 = vmatprep.mubr.bf16.mxu0 0
        %931 = vmatmul.mubr.bf16.gmra.mxu0 %v668
        %v932 = vpop.f32.mrf.mxu0
        %v933 = vadd.f32 %v559, %v932
        %v934 = vpop.f32.mrf.mxu0
        %v935 = vpop.f32.mrf.mxu0
        %v936 = vadd.f32 %v559, %v935
        %v937 = vpop.f32.mrf.mxu0
        %938 = vmatprep.mubr.bf16.mxu0 0
        %939 = vmatmul.mubr.bf16.gmra.mxu0 %v671
        %v940 = vpop.f32.mrf.mxu0
        %v941 = vadd.f32 %v559, %v940
        %v942 = vpop.f32.mrf.mxu0
        %v943 = vpop.f32.mrf.mxu0
        %v944 = vadd.f32 %v559, %v943
        %v945 = vpop.f32.mrf.mxu0
        %946 = vmatprep.mubr.bf16.mxu0 0
        %947 = vmatmul.mubr.bf16.gmra.mxu0 %v674
        %v948 = vpop.f32.mrf.mxu0
        %v949 = vadd.f32 %v559, %v948
        %v950 = vpop.f32.mrf.mxu0
        %v951 = vpop.f32.mrf.mxu0
        %v952 = vadd.f32 %v559, %v951
        %v953 = vpop.f32.mrf.mxu0
        %954 = vmatprep.mubr.bf16.mxu0 0
        %955 = vmatmul.mubr.bf16.gmra.mxu0 %v677
        %v956 = vpop.f32.mrf.mxu0
        %v957 = vadd.f32 %v559, %v956
        %v958 = vpop.f32.mrf.mxu0
        %v959 = vpop.f32.mrf.mxu0
        %v960 = vadd.f32 %v559, %v959
        %v961 = vpop.f32.mrf.mxu0
        %962 = vmatprep.mubr.bf16.mxu0 0
        %963 = vmatmul.mubr.bf16.gmra.mxu0 %v680
        %v964 = vpop.f32.mrf.mxu0
        %v965 = vadd.f32 %v559, %v964
        %v966 = vpop.f32.mrf.mxu0
        %v967 = vpop.f32.mrf.mxu0
        %v968 = vadd.f32 %v559, %v967
        %v969 = vpop.f32.mrf.mxu0
        %970 = vdwg.mxu0
        %v971 = vld [vmem:[#allocation6] sm:$0xf]
        %v972 = vld [vmem:[#allocation6 + $0x4] sm:$0xf]
        %v973 = vld [vmem:[#allocation6 + $0x8] sm:$0xf]
        %v974 = vld [vmem:[#allocation6 + $0xc] sm:$0xf]
        %v975 = vld [vmem:[#allocation6 + $0x10] sm:$0xf]
        %v976 = vld [vmem:[#allocation6 + $0x14] sm:$0xf]
        %v977 = vld [vmem:[#allocation6 + $0x18] sm:$0xf]
        %v978 = vld [vmem:[#allocation6 + $0x1c] sm:$0xf]
        %v979 = vld [vmem:[%s4] sm:$0x1]
        %v981 = vlaneseq
        %v982 = vshrl.u32 %v981, 7
        %v983 = vsub.s32 0, %v982
        %v984 = vrot.slane %v979, %v983
        %v994 = vunpack.c.l.b16 %v971
        %v995 = vunpack.c.l.b16 %v972
        %v996 = vunpack.c.l.b16 %v973
        %v997 = vunpack.c.l.b16 %v974
        %v998 = vunpack.c.l.b16 %v975
        %v999 = vunpack.c.l.b16 %v976
        %v1000 = vunpack.c.l.b16 %v977
        %v1001 = vunpack.c.l.b16 %v978
        %v1002 = vpack.c.b16 %v995, %v994
        %v1003 = vpack.c.b16 %v997, %v996
        %v1004 = vpack.c.b16 %v999, %v998
        %v1005 = vpack.c.b16 %v1001, %v1000
        %1010 = vmatprep.subr.bf16.mxu0 0
        %1011 = vmatpush1.bf16.msra.mxu0 0
        %1012 = vmatprep.subr.bf16.mxu0 0
        %1013 = vmatpush1.bf16.msra.mxu0 0
        %1014 = vmatprep.subr.bf16.mxu0 0
        %1015 = vmatpush1.bf16.msra.mxu0 0
        %1016 = vmatprep.subr.bf16.mxu0 0
        %1017 = vmatpush1.bf16.msra.mxu0 0
        %1018 = vmatprep.subr.bf16.mxu0 0
        %1019 = vmatpush1.bf16.msra.mxu0 %v1005
        %1020 = vmatprep.subr.bf16.mxu0 0
        %1021 = vmatpush1.bf16.msra.mxu0 %v1004
        %1022 = vmatprep.subr.bf16.mxu0 0
        %1023 = vmatpush1.bf16.msra.mxu0 %v1003
        %1024 = vmatprep.subr.bf16.mxu0 0
        %1025 = vmatpush1.bf16.msra.mxu0 %v1002
        %1026 = vmatprep.subr.bf16.mxu0 0
        %1027 = vmatpush2.bf16.msra.mxu0 0
        %1028 = vmatprep.subr.bf16.mxu0 0
        %1029 = vmatpush2.bf16.msra.mxu0 0
        %1030 = vmatprep.subr.bf16.mxu0 0
        %1031 = vmatpush2.bf16.msra.mxu0 0
        %1032 = vmatprep.subr.bf16.mxu0 0
        %1033 = vmatpush2.bf16.msra.mxu0 0
        %1034 = vmatprep.subr.bf16.mxu0 0
        %1035 = vmatpush2.bf16.msra.mxu0 0
        %1036 = vmatprep.subr.bf16.mxu0 0
        %1037 = vmatpush2.bf16.msra.mxu0 0
        %1038 = vmatprep.subr.bf16.mxu0 0
        %1039 = vmatpush2.bf16.msra.mxu0 0
        %1040 = vmatprep.subr.bf16.mxu0 0
        %1041 = vmatpush2.bf16.msra.mxu0 0
        %1042 = vmatprep.mubr.bf16.mxu0 0
        %1043 = vmatmul.mubr.bf16.gmra.mxu0 %v587
        %v1044 = vpop.f32.mrf.mxu0
        %v1045 = vadd.f32 %v984, %v1044
        %v1046 = vpop.f32.mrf.mxu0
        %v1047 = vpop.f32.mrf.mxu0
        %v1048 = vadd.f32 %v984, %v1047
        %v1049 = vpop.f32.mrf.mxu0
        %1050 = vmatprep.mubr.bf16.mxu0 0
        %1051 = vmatmul.mubr.bf16.gmra.mxu0 %v590
        %v1052 = vpop.f32.mrf.mxu0
        %v1053 = vadd.f32 %v984, %v1052
        %v1054 = vpop.f32.mrf.mxu0
        %v1055 = vpop.f32.mrf.mxu0
        %v1056 = vadd.f32 %v984, %v1055
        %v1057 = vpop.f32.mrf.mxu0
        %1058 = vmatprep.mubr.bf16.mxu0 0
        %1059 = vmatmul.mubr.bf16.gmra.mxu0 %v593
        %v1060 = vpop.f32.mrf.mxu0
        %v1061 = vadd.f32 %v984, %v1060
        %v1062 = vpop.f32.mrf.mxu0
        %v1063 = vpop.f32.mrf.mxu0
        %v1064 = vadd.f32 %v984, %v1063
        %v1065 = vpop.f32.mrf.mxu0
        %1066 = vmatprep.mubr.bf16.mxu0 0
        %1067 = vmatmul.mubr.bf16.gmra.mxu0 %v596
        %v1068 = vpop.f32.mrf.mxu0
        %v1069 = vadd.f32 %v984, %v1068
        %v1070 = vpop.f32.mrf.mxu0
        %v1071 = vpop.f32.mrf.mxu0
        %v1072 = vadd.f32 %v984, %v1071
        %v1073 = vpop.f32.mrf.mxu0
        %1074 = vmatprep.mubr.bf16.mxu0 0
        %1075 = vmatmul.mubr.bf16.gmra.mxu0 %v599
        %v1076 = vpop.f32.mrf.mxu0
        %v1077 = vadd.f32 %v984, %v1076
        %v1078 = vpop.f32.mrf.mxu0
        %v1079 = vpop.f32.mrf.mxu0
        %v1080 = vadd.f32 %v984, %v1079
        %v1081 = vpop.f32.mrf.mxu0
        %1082 = vmatprep.mubr.bf16.mxu0 0
        %1083 = vmatmul.mubr.bf16.gmra.mxu0 %v602
        %v1084 = vpop.f32.mrf.mxu0
        %v1085 = vadd.f32 %v984, %v1084
        %v1086 = vpop.f32.mrf.mxu0
        %v1087 = vpop.f32.mrf.mxu0
        %v1088 = vadd.f32 %v984, %v1087
        %v1089 = vpop.f32.mrf.mxu0
        %1090 = vmatprep.mubr.bf16.mxu0 0
        %1091 = vmatmul.mubr.bf16.gmra.mxu0 %v605
        %v1092 = vpop.f32.mrf.mxu0
        %v1093 = vadd.f32 %v984, %v1092
        %v1094 = vpop.f32.mrf.mxu0
        %v1095 = vpop.f32.mrf.mxu0
        %v1096 = vadd.f32 %v984, %v1095
        %v1097 = vpop.f32.mrf.mxu0
        %1098 = vmatprep.mubr.bf16.mxu0 0
        %1099 = vmatmul.mubr.bf16.gmra.mxu0 %v608
        %v1100 = vpop.f32.mrf.mxu0
        %v1101 = vadd.f32 %v984, %v1100
        %v1102 = vpop.f32.mrf.mxu0
        %v1103 = vpop.f32.mrf.mxu0
        %v1104 = vadd.f32 %v984, %v1103
        %v1105 = vpop.f32.mrf.mxu0
        %1106 = vmatprep.mubr.bf16.mxu0 0
        %1107 = vmatmul.mubr.bf16.gmra.mxu0 %v611
        %v1108 = vpop.f32.mrf.mxu0
        %v1109 = vadd.f32 %v984, %v1108
        %v1110 = vpop.f32.mrf.mxu0
        %v1111 = vpop.f32.mrf.mxu0
        %v1112 = vadd.f32 %v984, %v1111
        %v1113 = vpop.f32.mrf.mxu0
        %1114 = vmatprep.mubr.bf16.mxu0 0
        %1115 = vmatmul.mubr.bf16.gmra.mxu0 %v614
        %v1116 = vpop.f32.mrf.mxu0
        %v1117 = vadd.f32 %v984, %v1116
        %v1118 = vpop.f32.mrf.mxu0
        %v1119 = vpop.f32.mrf.mxu0
        %v1120 = vadd.f32 %v984, %v1119
        %v1121 = vpop.f32.mrf.mxu0
        %1122 = vmatprep.mubr.bf16.mxu0 0
        %1123 = vmatmul.mubr.bf16.gmra.mxu0 %v617
        %v1124 = vpop.f32.mrf.mxu0
        %v1125 = vadd.f32 %v984, %v1124
        %v1126 = vpop.f32.mrf.mxu0
        %v1127 = vpop.f32.mrf.mxu0
        %v1128 = vadd.f32 %v984, %v1127
        %v1129 = vpop.f32.mrf.mxu0
        %1130 = vmatprep.mubr.bf16.mxu0 0
        %1131 = vmatmul.mubr.bf16.gmra.mxu0 %v620
        %v1132 = vpop.f32.mrf.mxu0
        %v1133 = vadd.f32 %v984, %v1132
        %v1134 = vpop.f32.mrf.mxu0
        %v1135 = vpop.f32.mrf.mxu0
        %v1136 = vadd.f32 %v984, %v1135
        %v1137 = vpop.f32.mrf.mxu0
        %1138 = vmatprep.mubr.bf16.mxu0 0
        %1139 = vmatmul.mubr.bf16.gmra.mxu0 %v623
        %v1140 = vpop.f32.mrf.mxu0
        %v1141 = vadd.f32 %v984, %v1140
        %v1142 = vpop.f32.mrf.mxu0
        %v1143 = vpop.f32.mrf.mxu0
        %v1144 = vadd.f32 %v984, %v1143
        %v1145 = vpop.f32.mrf.mxu0
        %1146 = vmatprep.mubr.bf16.mxu0 0
        %1147 = vmatmul.mubr.bf16.gmra.mxu0 %v626
        %v1148 = vpop.f32.mrf.mxu0
        %v1149 = vadd.f32 %v984, %v1148
        %v1150 = vpop.f32.mrf.mxu0
        %v1151 = vpop.f32.mrf.mxu0
        %v1152 = vadd.f32 %v984, %v1151
        %v1153 = vpop.f32.mrf.mxu0
        %1154 = vmatprep.mubr.bf16.mxu0 0
        %1155 = vmatmul.mubr.bf16.gmra.mxu0 %v629
        %v1156 = vpop.f32.mrf.mxu0
        %v1157 = vadd.f32 %v984, %v1156
        %v1158 = vpop.f32.mrf.mxu0
        %v1159 = vpop.f32.mrf.mxu0
        %v1160 = vadd.f32 %v984, %v1159
        %v1161 = vpop.f32.mrf.mxu0
        %1162 = vmatprep.mubr.bf16.mxu0 0
        %1163 = vmatmul.mubr.bf16.gmra.mxu0 %v632
        %v1164 = vpop.f32.mrf.mxu0
        %v1165 = vadd.f32 %v984, %v1164
        %v1166 = vpop.f32.mrf.mxu0
        %v1167 = vpop.f32.mrf.mxu0
        %v1168 = vadd.f32 %v984, %v1167
        %v1169 = vpop.f32.mrf.mxu0
        %1170 = vmatprep.mubr.bf16.mxu0 0
        %1171 = vmatmul.mubr.bf16.gmra.mxu0 %v635
        %v1172 = vpop.f32.mrf.mxu0
        %v1173 = vadd.f32 %v984, %v1172
        %v1174 = vpop.f32.mrf.mxu0
        %v1175 = vpop.f32.mrf.mxu0
        %v1176 = vadd.f32 %v984, %v1175
        %v1177 = vpop.f32.mrf.mxu0
        %1178 = vmatprep.mubr.bf16.mxu0 0
        %1179 = vmatmul.mubr.bf16.gmra.mxu0 %v638
        %v1180 = vpop.f32.mrf.mxu0
        %v1181 = vadd.f32 %v984, %v1180
        %v1182 = vpop.f32.mrf.mxu0
        %v1183 = vpop.f32.mrf.mxu0
        %v1184 = vadd.f32 %v984, %v1183
        %v1185 = vpop.f32.mrf.mxu0
        %1186 = vmatprep.mubr.bf16.mxu0 0
        %1187 = vmatmul.mubr.bf16.gmra.mxu0 %v641
        %v1188 = vpop.f32.mrf.mxu0
        %v1189 = vadd.f32 %v984, %v1188
        %v1190 = vpop.f32.mrf.mxu0
        %v1191 = vpop.f32.mrf.mxu0
        %v1192 = vadd.f32 %v984, %v1191
        %v1193 = vpop.f32.mrf.mxu0
        %1194 = vmatprep.mubr.bf16.mxu0 0
        %1195 = vmatmul.mubr.bf16.gmra.mxu0 %v644
        %v1196 = vpop.f32.mrf.mxu0
        %v1197 = vadd.f32 %v984, %v1196
        %v1198 = vpop.f32.mrf.mxu0
        %v1199 = vpop.f32.mrf.mxu0
        %v1200 = vadd.f32 %v984, %v1199
        %v1201 = vpop.f32.mrf.mxu0
        %1202 = vmatprep.mubr.bf16.mxu0 0
        %1203 = vmatmul.mubr.bf16.gmra.mxu0 %v647
        %v1204 = vpop.f32.mrf.mxu0
        %v1205 = vadd.f32 %v984, %v1204
        %v1206 = vpop.f32.mrf.mxu0
        %v1207 = vpop.f32.mrf.mxu0
        %v1208 = vadd.f32 %v984, %v1207
        %v1209 = vpop.f32.mrf.mxu0
        %1210 = vmatprep.mubr.bf16.mxu0 0
        %1211 = vmatmul.mubr.bf16.gmra.mxu0 %v650
        %v1212 = vpop.f32.mrf.mxu0
        %v1213 = vadd.f32 %v984, %v1212
        %v1214 = vpop.f32.mrf.mxu0
        %v1215 = vpop.f32.mrf.mxu0
        %v1216 = vadd.f32 %v984, %v1215
        %v1217 = vpop.f32.mrf.mxu0
        %1218 = vmatprep.mubr.bf16.mxu0 0
        %1219 = vmatmul.mubr.bf16.gmra.mxu0 %v653
        %v1220 = vpop.f32.mrf.mxu0
        %v1221 = vadd.f32 %v984, %v1220
        %v1222 = vpop.f32.mrf.mxu0
        %v1223 = vpop.f32.mrf.mxu0
        %v1224 = vadd.f32 %v984, %v1223
        %v1225 = vpop.f32.mrf.mxu0
        %1226 = vmatprep.mubr.bf16.mxu0 0
        %1227 = vmatmul.mubr.bf16.gmra.mxu0 %v656
        %v1228 = vpop.f32.mrf.mxu0
        %v1229 = vadd.f32 %v984, %v1228
        %v1230 = vpop.f32.mrf.mxu0
        %v1231 = vpop.f32.mrf.mxu0
        %v1232 = vadd.f32 %v984, %v1231
        %v1233 = vpop.f32.mrf.mxu0
        %1234 = vmatprep.mubr.bf16.mxu0 0
        %1235 = vmatmul.mubr.bf16.gmra.mxu0 %v659
        %v1236 = vpop.f32.mrf.mxu0
        %v1237 = vadd.f32 %v984, %v1236
        %v1238 = vpop.f32.mrf.mxu0
        %v1239 = vpop.f32.mrf.mxu0
        %v1240 = vadd.f32 %v984, %v1239
        %v1241 = vpop.f32.mrf.mxu0
        %1242 = vmatprep.mubr.bf16.mxu0 0
        %1243 = vmatmul.mubr.bf16.gmra.mxu0 %v662
        %v1244 = vpop.f32.mrf.mxu0
        %v1245 = vadd.f32 %v984, %v1244
        %v1246 = vpop.f32.mrf.mxu0
        %v1247 = vpop.f32.mrf.mxu0
        %v1248 = vadd.f32 %v984, %v1247
        %v1249 = vpop.f32.mrf.mxu0
        %1250 = vmatprep.mubr.bf16.mxu0 0
        %1251 = vmatmul.mubr.bf16.gmra.mxu0 %v665
        %v1252 = vpop.f32.mrf.mxu0
        %v1253 = vadd.f32 %v984, %v1252
        %v1254 = vpop.f32.mrf.mxu0
        %v1255 = vpop.f32.mrf.mxu0
        %v1256 = vadd.f32 %v984, %v1255
        %v1257 = vpop.f32.mrf.mxu0
        %1258 = vmatprep.mubr.bf16.mxu0 0
        %1259 = vmatmul.mubr.bf16.gmra.mxu0 %v668
        %v1260 = vpop.f32.mrf.mxu0
        %v1261 = vadd.f32 %v984, %v1260
        %v1262 = vpop.f32.mrf.mxu0
        %v1263 = vpop.f32.mrf.mxu0
        %v1264 = vadd.f32 %v984, %v1263
        %v1265 = vpop.f32.mrf.mxu0
        %1266 = vmatprep.mubr.bf16.mxu0 0
        %1267 = vmatmul.mubr.bf16.gmra.mxu0 %v671
        %v1268 = vpop.f32.mrf.mxu0
        %v1269 = vadd.f32 %v984, %v1268
        %v1270 = vpop.f32.mrf.mxu0
        %v1271 = vpop.f32.mrf.mxu0
        %v1272 = vadd.f32 %v984, %v1271
        %v1273 = vpop.f32.mrf.mxu0
        %1274 = vmatprep.mubr.bf16.mxu0 0
        %1275 = vmatmul.mubr.bf16.gmra.mxu0 %v674
        %v1276 = vpop.f32.mrf.mxu0
        %v1277 = vadd.f32 %v984, %v1276
        %v1278 = vpop.f32.mrf.mxu0
        %v1279 = vpop.f32.mrf.mxu0
        %v1280 = vadd.f32 %v984, %v1279
        %v1281 = vpop.f32.mrf.mxu0
        %1282 = vmatprep.mubr.bf16.mxu0 0
        %1283 = vmatmul.mubr.bf16.gmra.mxu0 %v677
        %v1284 = vpop.f32.mrf.mxu0
        %v1285 = vadd.f32 %v984, %v1284
        %v1286 = vpop.f32.mrf.mxu0
        %v1287 = vpop.f32.mrf.mxu0
        %v1288 = vadd.f32 %v984, %v1287
        %v1289 = vpop.f32.mrf.mxu0
        %1290 = vmatprep.mubr.bf16.mxu0 0
        %1291 = vmatmul.mubr.bf16.gmra.mxu0 %v680
        %v1292 = vpop.f32.mrf.mxu0
        %v1293 = vadd.f32 %v984, %v1292
        %v1294 = vpop.f32.mrf.mxu0
        %v1295 = vpop.f32.mrf.mxu0
        %v1296 = vadd.f32 %v984, %v1295
        %v1297 = vpop.f32.mrf.mxu0
        %1298 = vdwg.mxu0
        %v1299 = vpack.c.bf16 %v720, %v717
        %v1300 = vpack.c.bf16 %v728, %v725
        %v1301 = vpack.c.bf16 %v736, %v733
        %v1302 = vpack.c.bf16 %v744, %v741
        %v1303 = vpack.c.bf16 %v752, %v749
        %v1304 = vpack.c.bf16 %v760, %v757
        %v1305 = vpack.c.bf16 %v768, %v765
        %v1306 = vpack.c.bf16 %v776, %v773
        %v1307 = vpack.c.bf16 %v784, %v781
        %v1308 = vpack.c.bf16 %v792, %v789
        %v1309 = vpack.c.bf16 %v800, %v797
        %v1310 = vpack.c.bf16 %v808, %v805
        %v1311 = vpack.c.bf16 %v816, %v813
        %v1312 = vpack.c.bf16 %v824, %v821
        %v1313 = vpack.c.bf16 %v832, %v829
        %v1314 = vpack.c.bf16 %v840, %v837
        %v1315 = vpack.c.bf16 %v848, %v845
        %v1316 = vpack.c.bf16 %v856, %v853
        %v1317 = vpack.c.bf16 %v864, %v861
        %v1318 = vpack.c.bf16 %v872, %v869
        %v1319 = vpack.c.bf16 %v880, %v877
        %v1320 = vpack.c.bf16 %v888, %v885
        %v1321 = vpack.c.bf16 %v896, %v893
        %v1322 = vpack.c.bf16 %v904, %v901
        %v1323 = vpack.c.bf16 %v912, %v909
        %v1324 = vpack.c.bf16 %v920, %v917
        %v1325 = vpack.c.bf16 %v928, %v925
        %v1326 = vpack.c.bf16 %v936, %v933
        %v1327 = vpack.c.bf16 %v944, %v941
        %v1328 = vpack.c.bf16 %v952, %v949
        %v1329 = vpack.c.bf16 %v960, %v957
        %v1330 = vpack.c.bf16 %v968, %v965
        %v1363 = vunpack.c.l.b16 %v1299
        %v1364 = vunpack.c.h.b16 %v1299
        %v1365 = vunpack.c.l.b16 %v1300
        %v1366 = vunpack.c.h.b16 %v1300
        %v1367 = vunpack.c.l.b16 %v1301
        %v1368 = vunpack.c.h.b16 %v1301
        %v1369 = vunpack.c.l.b16 %v1302
        %v1370 = vunpack.c.h.b16 %v1302
        %v1371 = vunpack.c.l.b16 %v1303
        %v1372 = vunpack.c.h.b16 %v1303
        %v1373 = vunpack.c.l.b16 %v1304
        %v1374 = vunpack.c.h.b16 %v1304
        %v1375 = vunpack.c.l.b16 %v1305
        %v1376 = vunpack.c.h.b16 %v1305
        %v1377 = vunpack.c.l.b16 %v1306
        %v1378 = vunpack.c.h.b16 %v1306
        %v1379 = vunpack.c.l.b16 %v1307
        %v1380 = vunpack.c.h.b16 %v1307
        %v1381 = vunpack.c.l.b16 %v1308
        %v1382 = vunpack.c.h.b16 %v1308
        %v1383 = vunpack.c.l.b16 %v1309
        %v1384 = vunpack.c.h.b16 %v1309
        %v1385 = vunpack.c.l.b16 %v1310
        %v1386 = vunpack.c.h.b16 %v1310
        %v1387 = vunpack.c.l.b16 %v1311
        %v1388 = vunpack.c.h.b16 %v1311
        %v1389 = vunpack.c.l.b16 %v1312
        %v1390 = vunpack.c.h.b16 %v1312
        %v1391 = vunpack.c.l.b16 %v1313
        %v1392 = vunpack.c.h.b16 %v1313
        %v1393 = vunpack.c.l.b16 %v1314
        %v1394 = vunpack.c.h.b16 %v1314
        %v1395 = vunpack.c.l.b16 %v1315
        %v1396 = vunpack.c.h.b16 %v1315
        %v1397 = vunpack.c.l.b16 %v1316
        %v1398 = vunpack.c.h.b16 %v1316
        %v1399 = vunpack.c.l.b16 %v1317
        %v1400 = vunpack.c.h.b16 %v1317
        %v1401 = vunpack.c.l.b16 %v1318
        %v1402 = vunpack.c.h.b16 %v1318
        %v1403 = vunpack.c.l.b16 %v1319
        %v1404 = vunpack.c.h.b16 %v1319
        %v1405 = vunpack.c.l.b16 %v1320
        %v1406 = vunpack.c.h.b16 %v1320
        %v1407 = vunpack.c.l.b16 %v1321
        %v1408 = vunpack.c.h.b16 %v1321
        %v1409 = vunpack.c.l.b16 %v1322
        %v1410 = vunpack.c.h.b16 %v1322
        %v1411 = vunpack.c.l.b16 %v1323
        %v1412 = vunpack.c.h.b16 %v1323
        %v1413 = vunpack.c.l.b16 %v1324
        %v1414 = vunpack.c.h.b16 %v1324
        %v1415 = vunpack.c.l.b16 %v1325
        %v1416 = vunpack.c.h.b16 %v1325
        %v1417 = vunpack.c.l.b16 %v1326
        %v1418 = vunpack.c.h.b16 %v1326
        %v1419 = vunpack.c.l.b16 %v1327
        %v1420 = vunpack.c.h.b16 %v1327
        %v1421 = vunpack.c.l.b16 %v1328
        %v1422 = vunpack.c.h.b16 %v1328
        %v1423 = vunpack.c.l.b16 %v1329
        %v1424 = vunpack.c.h.b16 %v1329
        %v1425 = vunpack.c.l.b16 %v1330
        %v1426 = vunpack.c.h.b16 %v1330
        %v1427 = vpack.c.b16 %v1363, %v1363
        %v1428 = vpack.c.b16 %v1364, %v1364
        %v1429 = vpack.c.b16 %v1365, %v1365
        %v1430 = vpack.c.b16 %v1366, %v1366
        %v1431 = vpack.c.b16 %v1367, %v1367
        %v1432 = vpack.c.b16 %v1368, %v1368
        %v1433 = vpack.c.b16 %v1369, %v1369
        %v1434 = vpack.c.b16 %v1370, %v1370
        %v1435 = vpack.c.b16 %v1371, %v1371
        %v1436 = vpack.c.b16 %v1372, %v1372
        %v1437 = vpack.c.b16 %v1373, %v1373
        %v1438 = vpack.c.b16 %v1374, %v1374
        %v1439 = vpack.c.b16 %v1375, %v1375
        %v1440 = vpack.c.b16 %v1376, %v1376
        %v1441 = vpack.c.b16 %v1377, %v1377
        %v1442 = vpack.c.b16 %v1378, %v1378
        %v1443 = vpack.c.b16 %v1379, %v1379
        %v1444 = vpack.c.b16 %v1380, %v1380
        %v1445 = vpack.c.b16 %v1381, %v1381
        %v1446 = vpack.c.b16 %v1382, %v1382
        %v1447 = vpack.c.b16 %v1383, %v1383
        %v1448 = vpack.c.b16 %v1384, %v1384
        %v1449 = vpack.c.b16 %v1385, %v1385
        %v1450 = vpack.c.b16 %v1386, %v1386
        %v1451 = vpack.c.b16 %v1387, %v1387
        %v1452 = vpack.c.b16 %v1388, %v1388
        %v1453 = vpack.c.b16 %v1389, %v1389
        %v1454 = vpack.c.b16 %v1390, %v1390
        %v1455 = vpack.c.b16 %v1391, %v1391
        %v1456 = vpack.c.b16 %v1392, %v1392
        %v1457 = vpack.c.b16 %v1393, %v1393
        %v1458 = vpack.c.b16 %v1394, %v1394
        %v1459 = vpack.c.b16 %v1395, %v1395
        %v1460 = vpack.c.b16 %v1396, %v1396
        %v1461 = vpack.c.b16 %v1397, %v1397
        %v1462 = vpack.c.b16 %v1398, %v1398
        %v1463 = vpack.c.b16 %v1399, %v1399
        %v1464 = vpack.c.b16 %v1400, %v1400
        %v1465 = vpack.c.b16 %v1401, %v1401
        %v1466 = vpack.c.b16 %v1402, %v1402
        %v1467 = vpack.c.b16 %v1403, %v1403
        %v1468 = vpack.c.b16 %v1404, %v1404
        %v1469 = vpack.c.b16 %v1405, %v1405
        %v1470 = vpack.c.b16 %v1406, %v1406
        %v1471 = vpack.c.b16 %v1407, %v1407
        %v1472 = vpack.c.b16 %v1408, %v1408
        %v1473 = vpack.c.b16 %v1409, %v1409
        %v1474 = vpack.c.b16 %v1410, %v1410
        %v1475 = vpack.c.b16 %v1411, %v1411
        %v1476 = vpack.c.b16 %v1412, %v1412
        %v1477 = vpack.c.b16 %v1413, %v1413
        %v1478 = vpack.c.b16 %v1414, %v1414
        %v1479 = vpack.c.b16 %v1415, %v1415
        %v1480 = vpack.c.b16 %v1416, %v1416
        %v1481 = vpack.c.b16 %v1417, %v1417
        %v1482 = vpack.c.b16 %v1418, %v1418
        %v1483 = vpack.c.b16 %v1419, %v1419
        %v1484 = vpack.c.b16 %v1420, %v1420
        %v1485 = vpack.c.b16 %v1421, %v1421
        %v1486 = vpack.c.b16 %v1422, %v1422
        %v1487 = vpack.c.b16 %v1423, %v1423
        %v1488 = vpack.c.b16 %v1424, %v1424
        %v1489 = vpack.c.b16 %v1425, %v1425
        %v1490 = vpack.c.b16 %v1426, %v1426
        %vm1555 = vcmask 519168
        %1556 = vst.msk [vmem:[%s341] sm:$0xf] %vm1555, %v1427
        %1557 = vst.msk [vmem:[%s341 + $0x4] sm:$0xf] %vm1555, %v1428
        %1558 = vst.msk [vmem:[%s341 + $0x8] sm:$0xf] %vm1555, %v1429
        %1559 = vst.msk [vmem:[%s341 + $0xc] sm:$0xf] %vm1555, %v1430
        %1560 = vst.msk [vmem:[%s341 + $0x10] sm:$0xf] %vm1555, %v1431
        %1561 = vst.msk [vmem:[%s341 + $0x14] sm:$0xf] %vm1555, %v1432
        %1562 = vst.msk [vmem:[%s341 + $0x18] sm:$0xf] %vm1555, %v1433
        %1563 = vst.msk [vmem:[%s341 + $0x1c] sm:$0xf] %vm1555, %v1434
        %1564 = vst.msk [vmem:[%s341 + $0x20] sm:$0xf] %vm1555, %v1435
        %1565 = vst.msk [vmem:[%s341 + $0x24] sm:$0xf] %vm1555, %v1436
        %1566 = vst.msk [vmem:[%s341 + $0x28] sm:$0xf] %vm1555, %v1437
        %1567 = vst.msk [vmem:[%s341 + $0x2c] sm:$0xf] %vm1555, %v1438
        %1568 = vst.msk [vmem:[%s341 + $0x30] sm:$0xf] %vm1555, %v1439
        %1569 = vst.msk [vmem:[%s341 + $0x34] sm:$0xf] %vm1555, %v1440
        %1570 = vst.msk [vmem:[%s341 + $0x38] sm:$0xf] %vm1555, %v1441
        %1571 = vst.msk [vmem:[%s341 + $0x3c] sm:$0xf] %vm1555, %v1442
        %1572 = vst.msk [vmem:[%s341 + $0x40] sm:$0xf] %vm1555, %v1443
        %1573 = vst.msk [vmem:[%s341 + $0x44] sm:$0xf] %vm1555, %v1444
        %1574 = vst.msk [vmem:[%s341 + $0x48] sm:$0xf] %vm1555, %v1445
        %1575 = vst.msk [vmem:[%s341 + $0x4c] sm:$0xf] %vm1555, %v1446
        %1576 = vst.msk [vmem:[%s341 + $0x50] sm:$0xf] %vm1555, %v1447
        %1577 = vst.msk [vmem:[%s341 + $0x54] sm:$0xf] %vm1555, %v1448
        %1578 = vst.msk [vmem:[%s341 + $0x58] sm:$0xf] %vm1555, %v1449
        %1579 = vst.msk [vmem:[%s341 + $0x5c] sm:$0xf] %vm1555, %v1450
        %1580 = vst.msk [vmem:[%s341 + $0x60] sm:$0xf] %vm1555, %v1451
        %1581 = vst.msk [vmem:[%s341 + $0x64] sm:$0xf] %vm1555, %v1452
        %1582 = vst.msk [vmem:[%s341 + $0x68] sm:$0xf] %vm1555, %v1453
        %1583 = vst.msk [vmem:[%s341 + $0x6c] sm:$0xf] %vm1555, %v1454
        %1584 = vst.msk [vmem:[%s341 + $0x70] sm:$0xf] %vm1555, %v1455
        %1585 = vst.msk [vmem:[%s341 + $0x74] sm:$0xf] %vm1555, %v1456
        %1586 = vst.msk [vmem:[%s341 + $0x78] sm:$0xf] %vm1555, %v1457
        %1587 = vst.msk [vmem:[%s341 + $0x7c] sm:$0xf] %vm1555, %v1458
        %1588 = vst.msk [vmem:[%s341 + $0x80] sm:$0xf] %vm1555, %v1459
        %1589 = vst.msk [vmem:[%s341 + $0x84] sm:$0xf] %vm1555, %v1460
        %1590 = vst.msk [vmem:[%s341 + $0x88] sm:$0xf] %vm1555, %v1461
        %1591 = vst.msk [vmem:[%s341 + $0x8c] sm:$0xf] %vm1555, %v1462
        %1592 = vst.msk [vmem:[%s341 + $0x90] sm:$0xf] %vm1555, %v1463
        %1593 = vst.msk [vmem:[%s341 + $0x94] sm:$0xf] %vm1555, %v1464
        %1594 = vst.msk [vmem:[%s341 + $0x98] sm:$0xf] %vm1555, %v1465
        %1595 = vst.msk [vmem:[%s341 + $0x9c] sm:$0xf] %vm1555, %v1466
        %1596 = vst.msk [vmem:[%s341 + $0xa0] sm:$0xf] %vm1555, %v1467
        %1597 = vst.msk [vmem:[%s341 + $0xa4] sm:$0xf] %vm1555, %v1468
        %1598 = vst.msk [vmem:[%s341 + $0xa8] sm:$0xf] %vm1555, %v1469
        %1599 = vst.msk [vmem:[%s341 + $0xac] sm:$0xf] %vm1555, %v1470
        %1600 = vst.msk [vmem:[%s341 + $0xb0] sm:$0xf] %vm1555, %v1471
        %1601 = vst.msk [vmem:[%s341 + $0xb4] sm:$0xf] %vm1555, %v1472
        %1602 = vst.msk [vmem:[%s341 + $0xb8] sm:$0xf] %vm1555, %v1473
        %1603 = vst.msk [vmem:[%s341 + $0xbc] sm:$0xf] %vm1555, %v1474
        %1604 = vst.msk [vmem:[%s341 + $0xc0] sm:$0xf] %vm1555, %v1475
        %1605 = vst.msk [vmem:[%s341 + $0xc4] sm:$0xf] %vm1555, %v1476
        %1606 = vst.msk [vmem:[%s341 + $0xc8] sm:$0xf] %vm1555, %v1477
        %1607 = vst.msk [vmem:[%s341 + $0xcc] sm:$0xf] %vm1555, %v1478
        %1608 = vst.msk [vmem:[%s341 + $0xd0] sm:$0xf] %vm1555, %v1479
        %1609 = vst.msk [vmem:[%s341 + $0xd4] sm:$0xf] %vm1555, %v1480
        %1610 = vst.msk [vmem:[%s341 + $0xd8] sm:$0xf] %vm1555, %v1481
        %1611 = vst.msk [vmem:[%s341 + $0xdc] sm:$0xf] %vm1555, %v1482
        %1612 = vst.msk [vmem:[%s341 + $0xe0] sm:$0xf] %vm1555, %v1483
        %1613 = vst.msk [vmem:[%s341 + $0xe4] sm:$0xf] %vm1555, %v1484
        %1614 = vst.msk [vmem:[%s341 + $0xe8] sm:$0xf] %vm1555, %v1485
        %1615 = vst.msk [vmem:[%s341 + $0xec] sm:$0xf] %vm1555, %v1486
        %1616 = vst.msk [vmem:[%s341 + $0xf0] sm:$0xf] %vm1555, %v1487
        %1617 = vst.msk [vmem:[%s341 + $0xf4] sm:$0xf] %vm1555, %v1488
        %1618 = vst.msk [vmem:[%s341 + $0xf8] sm:$0xf] %vm1555, %v1489
        %1619 = vst.msk [vmem:[%s341 + $0xfc] sm:$0xf] %vm1555, %v1490
        %v1620 = vpack.c.bf16 %v1048, %v1045
        %v1621 = vpack.c.bf16 %v1056, %v1053
        %v1622 = vpack.c.bf16 %v1064, %v1061
        %v1623 = vpack.c.bf16 %v1072, %v1069
        %v1624 = vpack.c.bf16 %v1080, %v1077
        %v1625 = vpack.c.bf16 %v1088, %v1085
        %v1626 = vpack.c.bf16 %v1096, %v1093
        %v1627 = vpack.c.bf16 %v1104, %v1101
        %v1628 = vpack.c.bf16 %v1112, %v1109
        %v1629 = vpack.c.bf16 %v1120, %v1117
        %v1630 = vpack.c.bf16 %v1128, %v1125
        %v1631 = vpack.c.bf16 %v1136, %v1133
        %v1632 = vpack.c.bf16 %v1144, %v1141
        %v1633 = vpack.c.bf16 %v1152, %v1149
        %v1634 = vpack.c.bf16 %v1160, %v1157
        %v1635 = vpack.c.bf16 %v1168, %v1165
        %v1636 = vpack.c.bf16 %v1176, %v1173
        %v1637 = vpack.c.bf16 %v1184, %v1181
        %v1638 = vpack.c.bf16 %v1192, %v1189
        %v1639 = vpack.c.bf16 %v1200, %v1197
        %v1640 = vpack.c.bf16 %v1208, %v1205
        %v1641 = vpack.c.bf16 %v1216, %v1213
        %v1642 = vpack.c.bf16 %v1224, %v1221
        %v1643 = vpack.c.bf16 %v1232, %v1229
        %v1644 = vpack.c.bf16 %v1240, %v1237
        %v1645 = vpack.c.bf16 %v1248, %v1245
        %v1646 = vpack.c.bf16 %v1256, %v1253
        %v1647 = vpack.c.bf16 %v1264, %v1261
        %v1648 = vpack.c.bf16 %v1272, %v1269
        %v1649 = vpack.c.bf16 %v1280, %v1277
        %v1650 = vpack.c.bf16 %v1288, %v1285
        %v1651 = vpack.c.bf16 %v1296, %v1293
        %v1684 = vunpack.c.l.b16 %v1620
        %v1685 = vunpack.c.h.b16 %v1620
        %v1686 = vunpack.c.l.b16 %v1621
        %v1687 = vunpack.c.h.b16 %v1621
        %v1688 = vunpack.c.l.b16 %v1622
        %v1689 = vunpack.c.h.b16 %v1622
        %v1690 = vunpack.c.l.b16 %v1623
        %v1691 = vunpack.c.h.b16 %v1623
        %v1692 = vunpack.c.l.b16 %v1624
        %v1693 = vunpack.c.h.b16 %v1624
        %v1694 = vunpack.c.l.b16 %v1625
        %v1695 = vunpack.c.h.b16 %v1625
        %v1696 = vunpack.c.l.b16 %v1626
        %v1697 = vunpack.c.h.b16 %v1626
        %v1698 = vunpack.c.l.b16 %v1627
        %v1699 = vunpack.c.h.b16 %v1627
        %v1700 = vunpack.c.l.b16 %v1628
        %v1701 = vunpack.c.h.b16 %v1628
        %v1702 = vunpack.c.l.b16 %v1629
        %v1703 = vunpack.c.h.b16 %v1629
        %v1704 = vunpack.c.l.b16 %v1630
        %v1705 = vunpack.c.h.b16 %v1630
        %v1706 = vunpack.c.l.b16 %v1631
        %v1707 = vunpack.c.h.b16 %v1631
        %v1708 = vunpack.c.l.b16 %v1632
        %v1709 = vunpack.c.h.b16 %v1632
        %v1710 = vunpack.c.l.b16 %v1633
        %v1711 = vunpack.c.h.b16 %v1633
        %v1712 = vunpack.c.l.b16 %v1634
        %v1713 = vunpack.c.h.b16 %v1634
        %v1714 = vunpack.c.l.b16 %v1635
        %v1715 = vunpack.c.h.b16 %v1635
        %v1716 = vunpack.c.l.b16 %v1636
        %v1717 = vunpack.c.h.b16 %v1636
        %v1718 = vunpack.c.l.b16 %v1637
        %v1719 = vunpack.c.h.b16 %v1637
        %v1720 = vunpack.c.l.b16 %v1638
        %v1721 = vunpack.c.h.b16 %v1638
        %v1722 = vunpack.c.l.b16 %v1639
        %v1723 = vunpack.c.h.b16 %v1639
        %v1724 = vunpack.c.l.b16 %v1640
        %v1725 = vunpack.c.h.b16 %v1640
        %v1726 = vunpack.c.l.b16 %v1641
        %v1727 = vunpack.c.h.b16 %v1641
        %v1728 = vunpack.c.l.b16 %v1642
        %v1729 = vunpack.c.h.b16 %v1642
        %v1730 = vunpack.c.l.b16 %v1643
        %v1731 = vunpack.c.h.b16 %v1643
        %v1732 = vunpack.c.l.b16 %v1644
        %v1733 = vunpack.c.h.b16 %v1644
        %v1734 = vunpack.c.l.b16 %v1645
        %v1735 = vunpack.c.h.b16 %v1645
        %v1736 = vunpack.c.l.b16 %v1646
        %v1737 = vunpack.c.h.b16 %v1646
        %v1738 = vunpack.c.l.b16 %v1647
        %v1739 = vunpack.c.h.b16 %v1647
        %v1740 = vunpack.c.l.b16 %v1648
        %v1741 = vunpack.c.h.b16 %v1648
        %v1742 = vunpack.c.l.b16 %v1649
        %v1743 = vunpack.c.h.b16 %v1649
        %v1744 = vunpack.c.l.b16 %v1650
        %v1745 = vunpack.c.h.b16 %v1650
        %v1746 = vunpack.c.l.b16 %v1651
        %v1747 = vunpack.c.h.b16 %v1651
        %v1748 = vpack.c.b16 %v1684, %v1684
        %v1749 = vpack.c.b16 %v1685, %v1685
        %v1750 = vpack.c.b16 %v1686, %v1686
        %v1751 = vpack.c.b16 %v1687, %v1687
        %v1752 = vpack.c.b16 %v1688, %v1688
        %v1753 = vpack.c.b16 %v1689, %v1689
        %v1754 = vpack.c.b16 %v1690, %v1690
        %v1755 = vpack.c.b16 %v1691, %v1691
        %v1756 = vpack.c.b16 %v1692, %v1692
        %v1757 = vpack.c.b16 %v1693, %v1693
        %v1758 = vpack.c.b16 %v1694, %v1694
        %v1759 = vpack.c.b16 %v1695, %v1695
        %v1760 = vpack.c.b16 %v1696, %v1696
        %v1761 = vpack.c.b16 %v1697, %v1697
        %v1762 = vpack.c.b16 %v1698, %v1698
        %v1763 = vpack.c.b16 %v1699, %v1699
        %v1764 = vpack.c.b16 %v1700, %v1700
        %v1765 = vpack.c.b16 %v1701, %v1701
        %v1766 = vpack.c.b16 %v1702, %v1702
        %v1767 = vpack.c.b16 %v1703, %v1703
        %v1768 = vpack.c.b16 %v1704, %v1704
        %v1769 = vpack.c.b16 %v1705, %v1705
        %v1770 = vpack.c.b16 %v1706, %v1706
        %v1771 = vpack.c.b16 %v1707, %v1707
        %v1772 = vpack.c.b16 %v1708, %v1708
        %v1773 = vpack.c.b16 %v1709, %v1709
        %v1774 = vpack.c.b16 %v1710, %v1710
        %v1775 = vpack.c.b16 %v1711, %v1711
        %v1776 = vpack.c.b16 %v1712, %v1712
        %v1777 = vpack.c.b16 %v1713, %v1713
        %v1778 = vpack.c.b16 %v1714, %v1714
        %v1779 = vpack.c.b16 %v1715, %v1715
        %v1780 = vpack.c.b16 %v1716, %v1716
        %v1781 = vpack.c.b16 %v1717, %v1717
        %v1782 = vpack.c.b16 %v1718, %v1718
        %v1783 = vpack.c.b16 %v1719, %v1719
        %v1784 = vpack.c.b16 %v1720, %v1720
        %v1785 = vpack.c.b16 %v1721, %v1721
        %v1786 = vpack.c.b16 %v1722, %v1722
        %v1787 = vpack.c.b16 %v1723, %v1723
        %v1788 = vpack.c.b16 %v1724, %v1724
        %v1789 = vpack.c.b16 %v1725, %v1725
        %v1790 = vpack.c.b16 %v1726, %v1726
        %v1791 = vpack.c.b16 %v1727, %v1727
        %v1792 = vpack.c.b16 %v1728, %v1728
        %v1793 = vpack.c.b16 %v1729, %v1729
        %v1794 = vpack.c.b16 %v1730, %v1730
        %v1795 = vpack.c.b16 %v1731, %v1731
        %v1796 = vpack.c.b16 %v1732, %v1732
        %v1797 = vpack.c.b16 %v1733, %v1733
        %v1798 = vpack.c.b16 %v1734, %v1734
        %v1799 = vpack.c.b16 %v1735, %v1735
        %v1800 = vpack.c.b16 %v1736, %v1736
        %v1801 = vpack.c.b16 %v1737, %v1737
        %v1802 = vpack.c.b16 %v1738, %v1738
        %v1803 = vpack.c.b16 %v1739, %v1739
        %v1804 = vpack.c.b16 %v1740, %v1740
        %v1805 = vpack.c.b16 %v1741, %v1741
        %v1806 = vpack.c.b16 %v1742, %v1742
        %v1807 = vpack.c.b16 %v1743, %v1743
        %v1808 = vpack.c.b16 %v1744, %v1744
        %v1809 = vpack.c.b16 %v1745, %v1745
        %v1810 = vpack.c.b16 %v1746, %v1746
        %v1811 = vpack.c.b16 %v1747, %v1747
        %1876 = vst.msk [vmem:[%s351] sm:$0xf] %vm1555, %v1748
        %1877 = vst.msk [vmem:[%s351 + $0x4] sm:$0xf] %vm1555, %v1749
        %1878 = vst.msk [vmem:[%s351 + $0x8] sm:$0xf] %vm1555, %v1750
        %1879 = vst.msk [vmem:[%s351 + $0xc] sm:$0xf] %vm1555, %v1751
        %1880 = vst.msk [vmem:[%s351 + $0x10] sm:$0xf] %vm1555, %v1752
        %1881 = vst.msk [vmem:[%s351 + $0x14] sm:$0xf] %vm1555, %v1753
        %1882 = vst.msk [vmem:[%s351 + $0x18] sm:$0xf] %vm1555, %v1754
        %1883 = vst.msk [vmem:[%s351 + $0x1c] sm:$0xf] %vm1555, %v1755
        %1884 = vst.msk [vmem:[%s351 + $0x20] sm:$0xf] %vm1555, %v1756
        %1885 = vst.msk [vmem:[%s351 + $0x24] sm:$0xf] %vm1555, %v1757
        %1886 = vst.msk [vmem:[%s351 + $0x28] sm:$0xf] %vm1555, %v1758
        %1887 = vst.msk [vmem:[%s351 + $0x2c] sm:$0xf] %vm1555, %v1759
        %1888 = vst.msk [vmem:[%s351 + $0x30] sm:$0xf] %vm1555, %v1760
        %1889 = vst.msk [vmem:[%s351 + $0x34] sm:$0xf] %vm1555, %v1761
        %1890 = vst.msk [vmem:[%s351 + $0x38] sm:$0xf] %vm1555, %v1762
        %1891 = vst.msk [vmem:[%s351 + $0x3c] sm:$0xf] %vm1555, %v1763
        %1892 = vst.msk [vmem:[%s351 + $0x40] sm:$0xf] %vm1555, %v1764
        %1893 = vst.msk [vmem:[%s351 + $0x44] sm:$0xf] %vm1555, %v1765
        %1894 = vst.msk [vmem:[%s351 + $0x48] sm:$0xf] %vm1555, %v1766
        %1895 = vst.msk [vmem:[%s351 + $0x4c] sm:$0xf] %vm1555, %v1767
        %1896 = vst.msk [vmem:[%s351 + $0x50] sm:$0xf] %vm1555, %v1768
        %1897 = vst.msk [vmem:[%s351 + $0x54] sm:$0xf] %vm1555, %v1769
        %1898 = vst.msk [vmem:[%s351 + $0x58] sm:$0xf] %vm1555, %v1770
        %1899 = vst.msk [vmem:[%s351 + $0x5c] sm:$0xf] %vm1555, %v1771
        %1900 = vst.msk [vmem:[%s351 + $0x60] sm:$0xf] %vm1555, %v1772
        %1901 = vst.msk [vmem:[%s351 + $0x64] sm:$0xf] %vm1555, %v1773
        %1902 = vst.msk [vmem:[%s351 + $0x68] sm:$0xf] %vm1555, %v1774
        %1903 = vst.msk [vmem:[%s351 + $0x6c] sm:$0xf] %vm1555, %v1775
        %1904 = vst.msk [vmem:[%s351 + $0x70] sm:$0xf] %vm1555, %v1776
        %1905 = vst.msk [vmem:[%s351 + $0x74] sm:$0xf] %vm1555, %v1777
        %1906 = vst.msk [vmem:[%s351 + $0x78] sm:$0xf] %vm1555, %v1778
        %1907 = vst.msk [vmem:[%s351 + $0x7c] sm:$0xf] %vm1555, %v1779
        %1908 = vst.msk [vmem:[%s351 + $0x80] sm:$0xf] %vm1555, %v1780
        %1909 = vst.msk [vmem:[%s351 + $0x84] sm:$0xf] %vm1555, %v1781
        %1910 = vst.msk [vmem:[%s351 + $0x88] sm:$0xf] %vm1555, %v1782
        %1911 = vst.msk [vmem:[%s351 + $0x8c] sm:$0xf] %vm1555, %v1783
        %1912 = vst.msk [vmem:[%s351 + $0x90] sm:$0xf] %vm1555, %v1784
        %1913 = vst.msk [vmem:[%s351 + $0x94] sm:$0xf] %vm1555, %v1785
        %1914 = vst.msk [vmem:[%s351 + $0x98] sm:$0xf] %vm1555, %v1786
        %1915 = vst.msk [vmem:[%s351 + $0x9c] sm:$0xf] %vm1555, %v1787
        %1916 = vst.msk [vmem:[%s351 + $0xa0] sm:$0xf] %vm1555, %v1788
        %1917 = vst.msk [vmem:[%s351 + $0xa4] sm:$0xf] %vm1555, %v1789
        %1918 = vst.msk [vmem:[%s351 + $0xa8] sm:$0xf] %vm1555, %v1790
        %1919 = vst.msk [vmem:[%s351 + $0xac] sm:$0xf] %vm1555, %v1791
        %1920 = vst.msk [vmem:[%s351 + $0xb0] sm:$0xf] %vm1555, %v1792
        %1921 = vst.msk [vmem:[%s351 + $0xb4] sm:$0xf] %vm1555, %v1793
        %1922 = vst.msk [vmem:[%s351 + $0xb8] sm:$0xf] %vm1555, %v1794
        %1923 = vst.msk [vmem:[%s351 + $0xbc] sm:$0xf] %vm1555, %v1795
        %1924 = vst.msk [vmem:[%s351 + $0xc0] sm:$0xf] %vm1555, %v1796
        %1925 = vst.msk [vmem:[%s351 + $0xc4] sm:$0xf] %vm1555, %v1797
        %1926 = vst.msk [vmem:[%s351 + $0xc8] sm:$0xf] %vm1555, %v1798
        %1927 = vst.msk [vmem:[%s351 + $0xcc] sm:$0xf] %vm1555, %v1799
        %1928 = vst.msk [vmem:[%s351 + $0xd0] sm:$0xf] %vm1555, %v1800
        %1929 = vst.msk [vmem:[%s351 + $0xd4] sm:$0xf] %vm1555, %v1801
        %1930 = vst.msk [vmem:[%s351 + $0xd8] sm:$0xf] %vm1555, %v1802
        %1931 = vst.msk [vmem:[%s351 + $0xdc] sm:$0xf] %vm1555, %v1803
        %1932 = vst.msk [vmem:[%s351 + $0xe0] sm:$0xf] %vm1555, %v1804
        %1933 = vst.msk [vmem:[%s351 + $0xe4] sm:$0xf] %vm1555, %v1805
        %1934 = vst.msk [vmem:[%s351 + $0xe8] sm:$0xf] %vm1555, %v1806
        %1935 = vst.msk [vmem:[%s351 + $0xec] sm:$0xf] %vm1555, %v1807
        %1936 = vst.msk [vmem:[%s351 + $0xf0] sm:$0xf] %vm1555, %v1808
        %1937 = vst.msk [vmem:[%s351 + $0xf4] sm:$0xf] %vm1555, %v1809
        %1938 = vst.msk [vmem:[%s351 + $0xf8] sm:$0xf] %vm1555, %v1810
        %1939 = vst.msk [vmem:[%s351 + $0xfc] sm:$0xf] %vm1555, %v1811
        %s1940 = smul.u32 64, %s27
        %p1941 = scmp.lt.s32.totalorder %s26, 1
        %s1942 = scalar_select %p1941, %s26, 1
        %p1943 = scmp.lt.s32.totalorder %s1940, 127
        %s1944 = scalar_select %p1943, %s1940, 127
        %s1945 = smul.addr %s1942, 128
        %s1946 = sadd.s32 %s1944, %s1945
        %s1947 = smul.addr %s1946, 4
        %s1948 = scalar_lea.vmem %s5, %s1947
        %s1949 = smul.u32 64, %s27
        %p1950 = scmp.lt.s32.totalorder %s26, 1
        %s1951 = scalar_select %p1950, %s26, 1
        %p1952 = scmp.lt.s32.totalorder %s1949, 127
        %s1953 = scalar_select %p1952, %s1949, 127
        %s1954 = smul.addr %s1951, 128
        %s1955 = sadd.s32 %s1953, %s1954
        %s1956 = smul.addr %s1955, 4
        %s1957 = scalar_lea.vmem %s6, %s1956
        // Predicated region
        $region53: #{tpu_custom_call.1} parent=39 // pred_check
          %p1958 = pneg %p166
        $region54: #{tpu_custom_call.1} parent=39 // pred_check_branch
          %1960 = sbr.rel (%p1958) target = $region56
        $region55: #{tpu_custom_call.1} parent=39 // pred_region
          %s1961 = smul.u32 64, %s27
        $region56: #{tpu_custom_call.1} parent=39 // pred_fallthru
          _
        // Predicated region
        $region57: #{tpu_custom_call.1} parent=39 // pred_check
          %p1962 = pneg %p194
        $region58: #{tpu_custom_call.1} parent=39 // pred_check_branch
          %1964 = sbr.rel (%p1962) target = $region60
        $region59: #{tpu_custom_call.1} parent=39 // pred_region
          %s1965 = smul.u32 64, %s27
        $region60: #{tpu_custom_call.1} parent=39 // pred_fallthru
          _
      $region40: #{tpu_custom_call.1} parent=5 // pred_fallthru
        _
      %p1966 = scmp.le.s32.totalorder 2, %s17
      // Predicated region
      $region61: #{tpu_custom_call.1} parent=5 // pred_check
        %p1967 = pneg %p1966
      $region62: #{tpu_custom_call.1} parent=5 // pred_check_branch
        %1969 = sbr.rel (%p1967) target = $region64
      $region63: #{tpu_custom_call.1} parent=5 // pred_region
        %s1970 = ssub.s32 %s17, 2
        // Predicated region
        $region65: #{tpu_custom_call.1} parent=63 // pred_check
          %p1971 = pneg %p172
        $region66: #{tpu_custom_call.1} parent=63 // pred_check_branch
          %1973 = sbr.rel (%p1971) target = $region68
        $region67: #{tpu_custom_call.1} parent=63 // pred_region
          %s1974 = smul.u32 64, %s29
          %p1975 = scmp.lt.s32.totalorder %s28, 1
          %s1976 = scalar_select %p1975, %s28, 1
          %p1977 = scmp.lt.s32.totalorder %s1974, 127
          %s1978 = scalar_select %p1977, %s1974, 127
          %s1979 = smul.addr %s1976, 128
          %s1980 = sadd.s32 %s1978, %s1979
          %s1981 = smul.addr %s1980, 4
          %s1982 = scalar_lea.vmem %s5, %s1981
        $region68: #{tpu_custom_call.1} parent=63 // pred_fallthru
          _
        // Predicated region
        $region69: #{tpu_custom_call.1} parent=63 // pred_check
          %p1983 = pneg %p200
        $region70: #{tpu_custom_call.1} parent=63 // pred_check_branch
          %1985 = sbr.rel (%p1983) target = $region72
        $region71: #{tpu_custom_call.1} parent=63 // pred_region
          %s1986 = smul.u32 64, %s29
          %p1987 = scmp.lt.s32.totalorder %s28, 1
          %s1988 = scalar_select %p1987, %s28, 1
          %p1989 = scmp.lt.s32.totalorder %s1986, 127
          %s1990 = scalar_select %p1989, %s1986, 127
          %s1991 = smul.addr %s1988, 128
          %s1992 = sadd.s32 %s1990, %s1991
          %s1993 = smul.addr %s1992, 4
          %s1994 = scalar_lea.vmem %s6, %s1993
        $region72: #{tpu_custom_call.1} parent=63 // pred_fallthru
          _
      $region64: #{tpu_custom_call.1} parent=5 // pred_fallthru
        _
    $region6: #{tpu_custom_call.1} parent=1 // loop_footer
      %s21 = sadd.s32 1, %s17
    $region7: #{tpu_custom_call.1} parent=1 // loop_footer_branch
      %16 = sbr.rel target = $region3
    $region8: #{tpu_custom_call.1} parent=1 // loop_exit
      _
    %1995 = vsyncpa [#allocation3], 1
    %s1996 = scalar_lea.sflag [#allocation3], 1
    %1997 = vsyncpa %s1996, 1
    %1998 = vsyncpa [#allocation5], 1

</llo_original>
